<compile_context>
chip_gen: v5e
topology: v5e:2x2
jax: 0.10.0
libtpu: 0.0.40
codegen_flags: <defaults>
</compile_context>

<pallas_src>
import jax
import jax.numpy as jnp
from jax.experimental import pallas as pl
from jax.experimental.pallas import tpu as pltpu

_VMEM_LIMIT = 48 * 1024 * 1024   # explicit scoped-VMEM cap, headroom under v7x 64 MiB


# --------------------------------------------------------------------------
# small helpers
# --------------------------------------------------------------------------

def _round_up(x, m):
    return ((x + m - 1) // m) * m


def _choose_tm(m):
    # 512-row tiles amortize the ~0.35us per-grid-step overhead; the
    # double-buffered bf16 (TM,K)+(K,Cp)+(TM,Cp) working set stays well under
    # the v7x scoped-VMEM default for realistic decoder channel counts.
    return 512 if m >= 512 else _round_up(m, 8)


def _pad_rows(a, tm):
    m = a.shape[0]
    mp = _round_up(m, tm)
    return a if mp == m else jnp.pad(a, ((0, mp - m), (0, 0)))


def _pad_cols(a, cp):
    c = a.shape[-1]
    return a if c == cp else jnp.pad(a, [(0, 0)] * (a.ndim - 1) + [(0, cp - c)])


def _im2col(x_nhwc, k, pad):
    """k x k stride-1 patches -> (N*Ho*Wo, k*k*C); rows ordered (n, y, x),
    patch columns ordered (dy, dx, c)."""
    N, H, W, C = x_nhwc.shape
    xp = jnp.pad(x_nhwc, ((0, 0), (pad, pad), (pad, pad), (0, 0)))
    Ho = H + 2 * pad - k + 1
    Wo = W + 2 * pad - k + 1
    cols = [xp[:, a:a + Ho, b:b + Wo, :] for a in range(k) for b in range(k)]
    patches = jnp.stack(cols, axis=3)                    # (N, Ho, Wo, k*k, C)
    return patches.reshape(N * Ho * Wo, k * k * C), Ho, Wo


def _subpixel_up_weight(wt):
    """ConvTranspose2d(k=4, s=2, p=1) weight (Cin, Cout, 4, 4) -> one
    (9*Cin, 4*Cout) matrix applied to 3x3 (pad=1) patches of the ORIGINAL
    input.  The 4 column groups are the 4 output sub-pixel phases (r, c):
    out[2*y+r, 2*x+c] = patches[y, x] @ W[:, (r, c)]."""
    cin, cout = wt.shape[0], wt.shape[1]
    w = jnp.zeros((3, 3, cin, 2, 2, cout), wt.dtype)
    for r in range(2):
        for dy in ((0, 1) if r == 0 else (1, 2)):
            a = (3 - 2 * dy) if r == 0 else (4 - 2 * dy)
            for c in range(2):
                for dx in ((0, 1) if c == 0 else (1, 2)):
                    b = (3 - 2 * dx) if c == 0 else (4 - 2 * dx)
                    w = w.at[dy, dx, :, r, c, :].set(wt[:, :, a, b])
    return w.reshape(9 * cin, 4 * cout)


# --------------------------------------------------------------------------
# Pallas kernels
# --------------------------------------------------------------------------

def _matmul_bias_kernel(x_ref, w_ref, b_ref, o_ref):
    # x: (TM, K) bf16   w: (K, Cp) bf16   b: (1, Cp) f32   o: (TM, Cp) bf16
    y = jnp.dot(x_ref[...], w_ref[...], preferred_element_type=jnp.float32)
    o_ref[...] = (y + b_ref[...]).astype(o_ref.dtype)


def _conv_stats_kernel(p_ref, w_ref, y_ref, s_ref):
    # pass 1: conv-as-matmul (no bias: cancelled by BN mean subtraction) plus
    # per-tile channel sum / sum-of-squares for global batch statistics.
    y = jnp.dot(p_ref[...], w_ref[...], preferred_element_type=jnp.float32)
    y_ref[...] = y                                           # (TM, Cp) f32
    s = jnp.sum(y, axis=0, keepdims=True)                    # (1, Cp)
    ss = jnp.sum(y * y, axis=0, keepdims=True)               # (1, Cp)
    s_ref[...] = jnp.concatenate([s, ss], axis=0).reshape(1, 2, s.shape[-1])


def _bn_relu_kernel(y_ref, scale_ref, shift_ref, o_ref):
    # pass 2: y * scale + shift, ReLU   (scale/shift fold mean/var/gamma/beta)
    o_ref[...] = jnp.maximum(y_ref[...] * scale_ref[...] + shift_ref[...],
                             0.0).astype(o_ref.dtype)


# --------------------------------------------------------------------------
# pallas_call wrappers
# --------------------------------------------------------------------------

def matmul_bias(patches, w, b, tm):
    """Row-tiled matmul + bias (ConvTranspose2d sub-pixel hot path)."""
    mp, k = patches.shape
    _, cp = w.shape
    return pl.pallas_call(
        _matmul_bias_kernel,
        out_shape=jax.ShapeDtypeStruct((mp, cp), jnp.bfloat16),
        grid_spec=pltpu.PrefetchScalarGridSpec(
            num_scalar_prefetch=0,
            grid=(mp // tm,),
            in_specs=[
                pl.BlockSpec((tm, k), lambda i: (i, 0)),
                pl.BlockSpec((k, cp), lambda i: (0, 0)),
                pl.BlockSpec((1, cp), lambda i: (0, 0)),
            ],
            out_specs=pl.BlockSpec((tm, cp), lambda i: (i, 0)),
        ),
        compiler_params=pltpu.CompilerParams(
            dimension_semantics=("parallel",),
            vmem_limit_bytes=_VMEM_LIMIT),
    )(patches, w, b)


def conv_bn_relu(patches, w, gamma, beta, m_real, tm, out_dtype=jnp.float32):
    """Two-pass, row-tiled fused 3x3-conv (as matmul) + BatchNorm2d(train) + ReLU.

    patches rows beyond m_real are zero padding: with no conv bias they yield
    y == 0 and therefore contribute nothing to the channel sum / sumsq, so the
    batch statistics (divided by m_real) stay exact."""
    mp, k = patches.shape
    _, cp = w.shape
    nt = mp // tm

    # ---- pass 1: tiled matmul + per-tile channel sum / sumsq ----
    y, stats = pl.pallas_call(
        _conv_stats_kernel,
        out_shape=(jax.ShapeDtypeStruct((mp, cp), jnp.float32),
                   jax.ShapeDtypeStruct((nt, 2, cp), jnp.float32)),
        grid_spec=pltpu.PrefetchScalarGridSpec(
            num_scalar_prefetch=0,
            grid=(nt,),
            in_specs=[
                pl.BlockSpec((tm, k), lambda i: (i, 0)),
                pl.BlockSpec((k, cp), lambda i: (0, 0)),
            ],
            out_specs=(pl.BlockSpec((tm, cp), lambda i: (i, 0)),
                       pl.BlockSpec((1, 2, cp), lambda i: (i, 0, 0))),
        ),
        compiler_params=pltpu.CompilerParams(
            dimension_semantics=("parallel",),
            vmem_limit_bytes=_VMEM_LIMIT),
    )(patches, w)

    # ---- tiny global reduction + fold BN affine into scale/shift (plain JAX) ----
    tot = jnp.sum(stats, axis=0)                             # (2, cp)
    mean = tot[0] / m_real
    var = jnp.maximum(tot[1] / m_real - mean * mean, 0.0)    # biased var (PyTorch BN)
    inv = jax.lax.rsqrt(var + 1e-5)
    scale = gamma * inv
    shift = beta - mean * scale

    # ---- pass 2: tiled normalize + affine + ReLU ----
    out = pl.pallas_call(
        _bn_relu_kernel,
        out_shape=jax.ShapeDtypeStruct((mp, cp), out_dtype),
        grid_spec=pltpu.PrefetchScalarGridSpec(
            num_scalar_prefetch=0,
            grid=(nt,),
            in_specs=[
                pl.BlockSpec((tm, cp), lambda i: (i, 0)),
                pl.BlockSpec((1, cp), lambda i: (0, 0)),
                pl.BlockSpec((1, cp), lambda i: (0, 0)),
            ],
            out_specs=pl.BlockSpec((tm, cp), lambda i: (i, 0)),
        ),
        compiler_params=pltpu.CompilerParams(
            dimension_semantics=("parallel",),
            vmem_limit_bytes=_VMEM_LIMIT),
    )(y, scale.reshape(1, cp), shift.reshape(1, cp))
    return out


# --------------------------------------------------------------------------
# forward pass (NCHW boundary, NHWC internally)
# --------------------------------------------------------------------------

def decoder_block_forward(x_nchw, skip_nchw, params):
    N, Cin, H, W = x_nchw.shape
    x = jnp.transpose(x_nchw, (0, 2, 3, 1))                  # NHWC
    skip = jnp.transpose(skip_nchw, (0, 2, 3, 1))

    # ---- ConvTranspose2d(k=4, s=2, p=1) via 4-phase sub-pixel matmul ----
    wt, bt = params["up_w"], params["up_b"]                  # (Cin, Cout, 4, 4), (Cout,)
    Cout = wt.shape[1]
    cup = _round_up(4 * Cout, 128)                           # lane-dense output columns
    w_up = _pad_cols(_subpixel_up_weight(wt), cup).astype(jnp.bfloat16)
    b_up = _pad_cols(jnp.tile(bt, 4).reshape(1, 4 * Cout), cup)   # (1, cup) f32

    patches_up, _, _ = _im2col(x.astype(jnp.bfloat16), 3, 1)      # (N*H*W, 9*Cin)
    m_up = patches_up.shape[0]
    tm_up = _choose_tm(m_up)
    patches_up = _pad_rows(patches_up, tm_up)
    y4 = matmul_bias(patches_up, w_up, b_up, tm_up)               # (Mp, cup) bf16
    y4 = y4[:m_up, :4 * Cout].reshape(N, H, W, 2, 2, Cout)
    # pixel-shuffle: out[2y+r, 2x+c] = phase(r, c)[y, x]
    y_up = jnp.transpose(y4, (0, 1, 3, 2, 4, 5)).reshape(N, 2 * H, 2 * W, Cout)

    # ---- concat skip along channels ----
    cat = jnp.concatenate([y_up, skip.astype(jnp.bfloat16)], axis=-1)
    Ccat = cat.shape[-1]

    # ---- Conv2d(Ccat -> Cout, 3x3, pad 1) + BatchNorm2d(train) + ReLU ----
    wc = params["conv_w"]                                    # (Cout, Ccat, 3, 3)
    c2p = _round_up(Cout, 128)
    w2 = jnp.transpose(wc, (2, 3, 1, 0)).reshape(9 * Ccat, Cout)
    w2 = _pad_cols(w2, c2p).astype(jnp.bfloat16)
    gamma = _pad_cols(params["bn_gamma"].reshape(1, Cout), c2p).reshape(-1)
    beta = _pad_cols(params["bn_beta"].reshape(1, Cout), c2p).reshape(-1)
    # NOTE: params["conv_b"] is intentionally NOT applied: training-mode BN
    # subtracts the per-channel batch mean, so the conv bias cancels exactly.

    # TODO(synk): fuse the 3x3 patch extraction (spatial tile + 1-px halo DMA)
    # into the pass-1 kernel to remove this 9x im2col expansion in HBM.
    patches2, H2, W2 = _im2col(cat, 3, 1)                    # (N*2H*2W, 9*Ccat) bf16
    m2 = patches2.shape[0]
    tm2 = _choose_tm(m2)
    patches2 = _pad_rows(patches2, tm2)
    out = conv_bn_relu(patches2, w2, gamma, beta, m2, tm2)   # (Mp, c2p) f32
    out = out[:m2, :Cout].reshape(N, H2, W2, Cout)
    return jnp.transpose(out, (0, 3, 1, 2))                  # back to NCHW


# --------------------------------------------------------------------------
# deterministic parameter init + demo
# --------------------------------------------------------------------------

def init_params(key, in_channels, skip_channels, out_channels):
    k1, k2, k3, k4, k5, k6 = jax.random.split(key, 6)
    cat_channels = out_channels + skip_channels
    return {
        # ConvTranspose2d weight (in, out, kH, kW), bias (out,)
        "up_w": 0.1 * jax.random.normal(k1, (in_channels, out_channels, 4, 4), jnp.float32),
        "up_b": 0.1 * jax.random.normal(k2, (out_channels,), jnp.float32),
        # Conv2d weight (out, in, 3, 3), bias (out,)  (bias unused: cancelled by BN)
        "conv_w": 0.1 * jax.random.normal(k3, (out_channels, cat_channels, 3, 3), jnp.float32),
        "conv_b": 0.1 * jax.random.normal(k4, (out_channels,), jnp.float32),
        # BatchNorm2d affine params
        "bn_gamma": 1.0 + 0.1 * jax.random.normal(k5, (out_channels,), jnp.float32),
        "bn_beta": 0.1 * jax.random.normal(k6, (out_channels,), jnp.float32),
    }


if __name__ == "__main__":
    key = jax.random.PRNGKey(0)
    kx, ks, kp = jax.random.split(key, 3)

    in_channels, skip_channels, out_channels = 8, 4, 8
    N, H, W = 2, 8, 8
    x = jax.random.normal(kx, (N, in_channels, H, W), jnp.float32)            # NCHW
    skip = jax.random.normal(ks, (N, skip_channels, 2 * H, 2 * W), jnp.float32)

    params = init_params(kp, in_channels, skip_channels, out_channels)

    out = jax.jit(decoder_block_forward)(x, skip, params)
    out = jax.block_until_ready(out)
    assert out.shape == (N, out_channels, 2 * H, 2 * W), out.shape
    print("KERNEL_OK")
</pallas_src>

<mosaic_0001>
module attributes {stable_mosaic.version = 11 : i64} {
  func.func @_matmul_bias_kernel(%arg0: i32, %arg1: memref<128x72xbf16, #tpu.memory_space<vmem>>, %arg2: memref<72x128xbf16, #tpu.memory_space<vmem>>, %arg3: memref<1x128xf32, #tpu.memory_space<vmem>>, %arg4: memref<128x128xbf16, #tpu.memory_space<vmem>>) attributes {dimension_semantics = [#tpu.dimension_semantics<parallel>], iteration_bounds = array<i64: 1>, scalar_prefetch = 0 : i64, scratch_operands = 0 : i64, tpu.core_type = #tpu.core_type<tc>, window_params = [{transform_indices = @transform_0, window_bounds = array<i64: 128, 72>}, {pipeline_mode = #tpu.pipeline_mode<synchronous>, transform_indices = @transform_1, window_bounds = array<i64: 72, 128>}, {pipeline_mode = #tpu.pipeline_mode<synchronous>, transform_indices = @transform_2, window_bounds = array<i64: 1, 128>}, {transform_indices = @transform_3, window_bounds = array<i64: 128, 128>}]} {
    %c0 = arith.constant 0 : index
    %c0_0 = arith.constant 0 : index
    %0 = vector.load %arg1[%c0, %c0_0] : memref<128x72xbf16, #tpu.memory_space<vmem>>, vector<128x72xbf16>
    %c0_1 = arith.constant 0 : index
    %c0_2 = arith.constant 0 : index
    %1 = vector.load %arg2[%c0_1, %c0_2] : memref<72x128xbf16, #tpu.memory_space<vmem>>, vector<72x128xbf16>
    %cst = arith.constant dense<0.000000e+00> : vector<128x128xf32>
    %2 = tpu.matmul %0, %1, %cst {dimension_numbers = #tpu.dot_dimension_numbers<[1], [0], [0], [1], [0, 0, 1, 1], [], []>} : vector<128x72xbf16>, vector<72x128xbf16>, vector<128x128xf32> -> vector<128x128xf32>
    %c0_3 = arith.constant 0 : index
    %c0_4 = arith.constant 0 : index
    %3 = vector.load %arg3[%c0_3, %c0_4] : memref<1x128xf32, #tpu.memory_space<vmem>>, vector<1x128xf32>
    %4 = vector.broadcast %3 : vector<1x128xf32> to vector<128x128xf32>
    %5 = arith.addf %2, %4 : vector<128x128xf32>
    %6 = arith.truncf %5 : vector<128x128xf32> to vector<128x128xbf16>
    %c0_5 = arith.constant 0 : index
    %c0_6 = arith.constant 0 : index
    %7 = vector.load %arg4[%c0_5, %c0_6] : memref<128x128xbf16, #tpu.memory_space<vmem>>, vector<128x128xbf16>
    tpu.vector_store %arg4[%c0_5, %c0_6], %6 {strides = array<i32>} : memref<128x128xbf16, #tpu.memory_space<vmem>>, vector<128x128xbf16>,
    return
  }
  func.func @transform_0(%arg0: i32) -> (i32, i32) {
    %c0_i32 = arith.constant 0 : i32
    %c0_i32_0 = arith.constant 0 : i32
    return %arg0, %c0_i32 : i32, i32
  }
  func.func @transform_1(%arg0: i32) -> (i32, i32) {
    %c0_i32 = arith.constant 0 : i32
    %c0_i32_0 = arith.constant 0 : i32
    %c0_i32_1 = arith.constant 0 : i32
    return %c0_i32, %c0_i32_0 : i32, i32
  }
  func.func @transform_2(%arg0: i32) -> (i32, i32) {
    %c0_i32 = arith.constant 0 : i32
    %c0_i32_0 = arith.constant 0 : i32
    %c0_i32_1 = arith.constant 0 : i32
    return %c0_i32, %c0_i32_0 : i32, i32
  }
  func.func @transform_3(%arg0: i32) -> (i32, i32) {
    %c0_i32 = arith.constant 0 : i32
    %c0_i32_0 = arith.constant 0 : i32
    return %arg0, %c0_i32 : i32, i32
  }
}

module attributes {stable_mosaic.version = 11 : i64} {
  func.func @_conv_stats_kernel(%arg0: i32, %arg1: memref<512x108xbf16, #tpu.memory_space<vmem>>, %arg2: memref<108x128xbf16, #tpu.memory_space<vmem>>, %arg3: memref<512x128xf32, #tpu.memory_space<vmem>>, %arg4: memref<1x2x128xf32, #tpu.memory_space<vmem>>) attributes {dimension_semantics = [#tpu.dimension_semantics<parallel>], iteration_bounds = array<i64: 1>, scalar_prefetch = 0 : i64, scratch_operands = 0 : i64, tpu.core_type = #tpu.core_type<tc>, window_params = [{transform_indices = @transform_0, window_bounds = array<i64: 512, 108>}, {pipeline_mode = #tpu.pipeline_mode<synchronous>, transform_indices = @transform_1, window_bounds = array<i64: 108, 128>}, {transform_indices = @transform_2, window_bounds = array<i64: 512, 128>}, {transform_indices = @transform_3, window_bounds = array<i64: 1, 2, 128>}]} {
    %c0 = arith.constant 0 : index
    %c0_0 = arith.constant 0 : index
    %0 = vector.load %arg1[%c0, %c0_0] : memref<512x108xbf16, #tpu.memory_space<vmem>>, vector<512x108xbf16>
    %c0_1 = arith.constant 0 : index
    %c0_2 = arith.constant 0 : index
    %1 = vector.load %arg2[%c0_1, %c0_2] : memref<108x128xbf16, #tpu.memory_space<vmem>>, vector<108x128xbf16>
    %cst = arith.constant dense<0.000000e+00> : vector<512x128xf32>
    %2 = tpu.matmul %0, %1, %cst {dimension_numbers = #tpu.dot_dimension_numbers<[1], [0], [0], [1], [0, 0, 1, 1], [], []>} : vector<512x108xbf16>, vector<108x128xbf16>, vector<512x128xf32> -> vector<512x128xf32>
    %c0_3 = arith.constant 0 : index
    %c0_4 = arith.constant 0 : index
    %3 = vector.load %arg3[%c0_3, %c0_4] : memref<512x128xf32, #tpu.memory_space<vmem>>, vector<512x128xf32>
    tpu.vector_store %arg3[%c0_3, %c0_4], %2 {strides = array<i32>} : memref<512x128xf32, #tpu.memory_space<vmem>>, vector<512x128xf32>,
    %cst_5 = arith.constant dense<0.000000e+00> : vector<128xf32>
    %4 = vector.multi_reduction <add>, %2, %cst_5 [0] : vector<512x128xf32> to vector<128xf32>
    %5 = vector.shape_cast %4 : vector<128xf32> to vector<1x128xf32>
    %6 = arith.mulf %2, %2 : vector<512x128xf32>
    %cst_6 = arith.constant dense<0.000000e+00> : vector<128xf32>
    %7 = vector.multi_reduction <add>, %6, %cst_6 [0] : vector<512x128xf32> to vector<128xf32>
    %8 = vector.shape_cast %7 : vector<128xf32> to vector<1x128xf32>
    %9 = tpu.concatenate %5, %8 in 0 : vector<1x128xf32>, vector<1x128xf32> -> vector<2x128xf32>
    %10 = vector.shape_cast %9 : vector<2x128xf32> to vector<1x2x128xf32>
    %c0_7 = arith.constant 0 : index
    %c0_8 = arith.constant 0 : index
    %c0_9 = arith.constant 0 : index
    %11 = vector.load %arg4[%c0_7, %c0_8, %c0_9] : memref<1x2x128xf32, #tpu.memory_space<vmem>>, vector<1x2x128xf32>
    tpu.vector_store %arg4[%c0_7, %c0_8, %c0_9], %10 {strides = array<i32>} : memref<1x2x128xf32, #tpu.memory_space<vmem>>, vector<1x2x128xf32>,
    return
  }
  func.func @transform_0(%arg0: i32) -> (i32, i32) {
    %c0_i32 = arith.constant 0 : i32
    %c0_i32_0 = arith.constant 0 : i32
    return %arg0, %c0_i32 : i32, i32
  }
  func.func @transform_1(%arg0: i32) -> (i32, i32) {
    %c0_i32 = arith.constant 0 : i32
    %c0_i32_0 = arith.constant 0 : i32
    %c0_i32_1 = arith.constant 0 : i32
    return %c0_i32, %c0_i32_0 : i32, i32
  }
  func.func @transform_2(%arg0: i32) -> (i32, i32) {
    %c0_i32 = arith.constant 0 : i32
    %c0_i32_0 = arith.constant 0 : i32
    return %arg0, %c0_i32 : i32, i32
  }
  func.func @transform_3(%arg0: i32) -> (i32, i32, i32) {
    %c0_i32 = arith.constant 0 : i32
    %c0_i32_0 = arith.constant 0 : i32
    %c0_i32_1 = arith.constant 0 : i32
    return %arg0, %c0_i32, %c0_i32_0 : i32, i32, i32
  }
}

module attributes {stable_mosaic.version = 11 : i64} {
  func.func @_bn_relu_kernel(%arg0: i32, %arg1: memref<512x128xf32, #tpu.memory_space<vmem>>, %arg2: memref<1x128xf32, #tpu.memory_space<vmem>>, %arg3: memref<1x128xf32, #tpu.memory_space<vmem>>, %arg4: memref<512x128xf32, #tpu.memory_space<vmem>>) attributes {dimension_semantics = [#tpu.dimension_semantics<parallel>], iteration_bounds = array<i64: 1>, scalar_prefetch = 0 : i64, scratch_operands = 0 : i64, tpu.core_type = #tpu.core_type<tc>, window_params = [{transform_indices = @transform_0, window_bounds = array<i64: 512, 128>}, {pipeline_mode = #tpu.pipeline_mode<synchronous>, transform_indices = @transform_1, window_bounds = array<i64: 1, 128>}, {pipeline_mode = #tpu.pipeline_mode<synchronous>, transform_indices = @transform_2, window_bounds = array<i64: 1, 128>}, {transform_indices = @transform_3, window_bounds = array<i64: 512, 128>}]} {
    %c0 = arith.constant 0 : index
    %c0_0 = arith.constant 0 : index
    %0 = vector.load %arg1[%c0, %c0_0] : memref<512x128xf32, #tpu.memory_space<vmem>>, vector<512x128xf32>
    %c0_1 = arith.constant 0 : index
    %c0_2 = arith.constant 0 : index
    %1 = vector.load %arg2[%c0_1, %c0_2] : memref<1x128xf32, #tpu.memory_space<vmem>>, vector<1x128xf32>
    %2 = vector.broadcast %1 : vector<1x128xf32> to vector<512x128xf32>
    %3 = arith.mulf %0, %2 : vector<512x128xf32>
    %c0_3 = arith.constant 0 : index
    %c0_4 = arith.constant 0 : index
    %4 = vector.load %arg3[%c0_3, %c0_4] : memref<1x128xf32, #tpu.memory_space<vmem>>, vector<1x128xf32>
    %5 = vector.broadcast %4 : vector<1x128xf32> to vector<512x128xf32>
    %6 = arith.addf %3, %5 : vector<512x128xf32>
    %cst = arith.constant 0.000000e+00 : f32
    %7 = vector.broadcast %cst : f32 to vector<512x128xf32>
    %8 = arith.maximumf %6, %7 : vector<512x128xf32>
    %c0_5 = arith.constant 0 : index
    %c0_6 = arith.constant 0 : index
    %9 = vector.load %arg4[%c0_5, %c0_6] : memref<512x128xf32, #tpu.memory_space<vmem>>, vector<512x128xf32>
    tpu.vector_store %arg4[%c0_5, %c0_6], %8 {strides = array<i32>} : memref<512x128xf32, #tpu.memory_space<vmem>>, vector<512x128xf32>,
    return
  }
  func.func @transform_0(%arg0: i32) -> (i32, i32) {
    %c0_i32 = arith.constant 0 : i32
    %c0_i32_0 = arith.constant 0 : i32
    return %arg0, %c0_i32 : i32, i32
  }
  func.func @transform_1(%arg0: i32) -> (i32, i32) {
    %c0_i32 = arith.constant 0 : i32
    %c0_i32_0 = arith.constant 0 : i32
    %c0_i32_1 = arith.constant 0 : i32
    return %c0_i32, %c0_i32_0 : i32, i32
  }
  func.func @transform_2(%arg0: i32) -> (i32, i32) {
    %c0_i32 = arith.constant 0 : i32
    %c0_i32_0 = arith.constant 0 : i32
    %c0_i32_1 = arith.constant 0 : i32
    return %c0_i32, %c0_i32_0 : i32, i32
  }
  func.func @transform_3(%arg0: i32) -> (i32, i32) {
    %c0_i32 = arith.constant 0 : i32
    %c0_i32_0 = arith.constant 0 : i32
    return %arg0, %c0_i32 : i32, i32
  }
}

</mosaic_0001>

<llo_original>
// kernel: tile.8
$region0: #{tile.8}
  #allocation0 [shape = 's32[1]{0}', space=sflag, size = 0x4, scoped, tag = 'scoped memory for tile.8']
  %s0 = inlined_call_operand.vmem [shape: f32[8], index: 0, kind: input, shape index: {}]
  %s1 = inlined_call_operand.vmem [shape: f32[4,8], index: 1, kind: output, shape index: {}]
  // Predicated region
  $region2: #{tile.8} parent=0 // pred_check
    _
  $region3: #{tile.8} parent=0 // pred_check_branch
    %3 = sbr.rel (0) target = $region5
  $region4: #{tile.8} parent=0 // pred_region
    _
  $region5: #{tile.8} parent=0 // pred_fallthru
    _
  %v4 = vld [vmem:[%s0] ss:$0 sm:$0xff]
  %5 = vst [vmem:[%s1] sm:$0xf] %v4

// kernel: tile.9
$region0: #{tile.9}
  %s0 = inlined_call_operand.vmem [shape: f32[4,8], index: 0, kind: input, shape index: {}]
  %s1 = inlined_call_operand.vmem [shape: f32[1,32], index: 1, kind: output, shape index: {}]
  $region1: #{tile.9} parent=0
    #allocation0 [shape = 'u8[4096]{0}', space=vmem, size = 0x1000, scoped, tag = 'scoped mem for output reshape']
    #allocation1 [shape = 'u8[4096]{0}', space=vmem, size = 0x1000, scoped, tag = 'scoped mem for input reshape']
    %s3 = ssub.s32 16, 1
    %v4 = vld [vmem:[%s0] sm:%s3]
    %5 = vst [vmem:[#allocation1] sm:%s3] %v4
    %v6 = vld [vmem:[#allocation1] sm:$0x1]
    %vm7 = vcmask 64512
    %8 = vst.msk [vmem:[#allocation0] sm:$0x1] %vm7, %v6
    %s9 = scalar_lea.vmem [#allocation1], 3
    %v10 = vld [vmem:[%s9] sm:$0x1]
    %11 = vrot.lane.b32.xlu0 %v10, 24
    %v12 = vpop.permute.xlu0 %11
    %vm13 = vcmask 261312
    %14 = vst.msk [vmem:[#allocation0] sm:$0x1] %vm13, %v12
    %s15 = scalar_lea.vmem [#allocation1], 2
    %v16 = vld [vmem:[%s15] sm:$0x1]
    %17 = vrot.lane.b32.xlu0 %v16, 16
    %v18 = vpop.permute.xlu0 %17
    %vm19 = vcmask 195712
    %20 = vst.msk [vmem:[#allocation0] sm:$0x1] %vm19, %v18
    %s21 = scalar_lea.vmem [#allocation1], 1
    %v22 = vld [vmem:[%s21] sm:$0x1]
    %23 = vrot.lane.b32.xlu0 %v22, 8
    %v24 = vpop.permute.xlu0 %23
    %vm25 = vcmask 130112
    %26 = vst.msk [vmem:[#allocation0] sm:$0x1] %vm25, %v24
    %s28 = ssub.s32 2, 1
    %v29 = vld [vmem:[#allocation0] sm:%s28]
    %s31 = ssub.s32 2, 1
    %32 = vst [vmem:[%s1] sm:%s31] %v29

// kernel: decoder_block_forward.3
$region0: #{decoder_block_forward.3}
  #allocation0 [shape = 'u32[]', space=smem, size = 0x4, offset = 0x4, fixed_abs, tag = 'smem constant byte address 0x4 - core index']
  #allocation1 [shape = 'u32[72,128]{1,0:T(1,128)}', space=vmem, size = 0x9000, scoped, tag = 'internal scratch']
  %s0 = inlined_call_operand.vmem [shape: bf16[128,72], index: 0, kind: input, shape index: {}]
  %s1 = inlined_call_operand.vmem [shape: bf16[72,128], index: 1, kind: input, shape index: {}]
  %s2 = inlined_call_operand.vmem [shape: f32[1,128], index: 2, kind: input, shape index: {}]
  %s3 = inlined_call_operand.vmem [shape: bf16[128,128], index: 3, kind: output, shape index: {}]
  %s4 = sld [smem:[#allocation0]]
  $region22: #{decoder_block_forward.3} parent=0
    _
  %s6 = ssub.s32 1, %s4
  %s7 = scalar_select 0, %s6, %s4
  // Predicated region
  $region2: #{decoder_block_forward.3} parent=0 // pred_check
    _
  $region3: #{decoder_block_forward.3} parent=0 // pred_check_branch
    %9 = sbr.rel (0) target = $region5
  $region4: #{decoder_block_forward.3} parent=0 // pred_region
    _
  $region5: #{decoder_block_forward.3} parent=0 // pred_fallthru
    _
  // Predicated region
  $region6: #{decoder_block_forward.3} parent=0 // pred_check
    _
  $region7: #{decoder_block_forward.3} parent=0 // pred_check_branch
    %11 = sbr.rel (0) target = $region9
  $region8: #{decoder_block_forward.3} parent=0 // pred_region
    _
  $region9: #{decoder_block_forward.3} parent=0 // pred_fallthru
    _
  // Predicated region
  $region10: #{decoder_block_forward.3} parent=0 // pred_check
    _
  $region11: #{decoder_block_forward.3} parent=0 // pred_check_branch
    %13 = sbr.rel (0) target = $region13
  $region12: #{decoder_block_forward.3} parent=0 // pred_region
    _
  $region13: #{decoder_block_forward.3} parent=0 // pred_fallthru
    _
  %v15 = vld [vmem:[%s0] sm:$0xf]
  %v16 = vld [vmem:[%s0 + $0x4] sm:$0xf]
  %v17 = vld [vmem:[%s0 + $0x8] sm:$0xf]
  %v18 = vld [vmem:[%s0 + $0xc] sm:$0xf]
  %v19 = vld [vmem:[%s0 + $0x10] sm:$0xf]
  %v20 = vld [vmem:[%s0 + $0x14] sm:$0xf]
  %v21 = vld [vmem:[%s0 + $0x18] sm:$0xf]
  %v22 = vld [vmem:[%s0 + $0x1c] sm:$0xf]
  %v23 = vld [vmem:[%s0 + $0x20] sm:$0xf]
  %v24 = vld [vmem:[%s0 + $0x24] sm:$0xf]
  %v25 = vld [vmem:[%s0 + $0x28] sm:$0xf]
  %v26 = vld [vmem:[%s0 + $0x2c] sm:$0xf]
  %v27 = vld [vmem:[%s0 + $0x30] sm:$0xf]
  %v28 = vld [vmem:[%s0 + $0x34] sm:$0xf]
  %v29 = vld [vmem:[%s0 + $0x38] sm:$0xf]
  %v30 = vld [vmem:[%s0 + $0x3c] sm:$0xf]
  %v31 = vld [vmem:[%s1] sm:$0xf]
  %v32 = vld [vmem:[%s1 + $0x4] sm:$0xf]
  %v33 = vld [vmem:[%s1 + $0x8] sm:$0xf]
  %v34 = vld [vmem:[%s1 + $0xc] sm:$0xf]
  %v35 = vld [vmem:[%s1 + $0x10] sm:$0xf]
  %v36 = vld [vmem:[%s1 + $0x14] sm:$0xf]
  %v37 = vld [vmem:[%s1 + $0x18] sm:$0xf]
  %v38 = vld [vmem:[%s1 + $0x1c] sm:$0xf]
  %v39 = vld [vmem:[%s1 + $0x20] sm:$0xf]
  %v40 = vld [vmem:[%s2] sm:$0x1]
  %v42 = vperm.slane %v40, 0
  %v60 = vunpack.c.l.b16 %v15
  %v61 = vunpack.c.l.b16 %v16
  %v62 = vunpack.c.l.b16 %v17
  %v63 = vunpack.c.l.b16 %v18
  %v64 = vunpack.c.l.b16 %v19
  %v65 = vunpack.c.l.b16 %v20
  %v66 = vunpack.c.l.b16 %v21
  %v67 = vunpack.c.l.b16 %v22
  %v68 = vunpack.c.l.b16 %v23
  %v69 = vunpack.c.l.b16 %v24
  %v70 = vunpack.c.l.b16 %v25
  %v71 = vunpack.c.l.b16 %v26
  %v72 = vunpack.c.l.b16 %v27
  %v73 = vunpack.c.l.b16 %v28
  %v74 = vunpack.c.l.b16 %v29
  %v75 = vunpack.c.l.b16 %v30
  %v76 = vpack.c.b16 %v61, %v60
  %v77 = vpack.c.b16 %v63, %v62
  %v78 = vpack.c.b16 %v65, %v64
  %v79 = vpack.c.b16 %v67, %v66
  %v80 = vpack.c.b16 %v69, %v68
  %v81 = vpack.c.b16 %v71, %v70
  %v82 = vpack.c.b16 %v73, %v72
  %v83 = vpack.c.b16 %v75, %v74
  %v93 = vunpack.c.l.b16 %v31
  %v94 = vunpack.c.l.b16 %v32
  %v95 = vunpack.c.l.b16 %v33
  %v96 = vunpack.c.l.b16 %v34
  %v97 = vunpack.c.l.b16 %v35
  %v98 = vunpack.c.l.b16 %v36
  %v99 = vunpack.c.l.b16 %v37
  %v100 = vunpack.c.l.b16 %v38
  %v101 = vunpack.c.l.b16 %v39
  %v102 = vpack.c.b16 %v94, %v93
  %v103 = vpack.c.b16 %v96, %v95
  %v104 = vpack.c.b16 %v98, %v97
  %v105 = vpack.c.b16 %v100, %v99
  %v106 = vpack.c.b16 %v101, %v101
  %vm111 = vcmask 588800
  %v113 = vsel %vm111, %v76, 0
  %v116 = vsel %vm111, %v77, 0
  %v119 = vsel %vm111, %v78, 0
  %v122 = vsel %vm111, %v79, 0
  %v125 = vsel %vm111, %v80, 0
  %v128 = vsel %vm111, %v81, 0
  %v131 = vsel %vm111, %v82, 0
  %v134 = vsel %vm111, %v83, 0
  %vm136 = vcmask 1043456
  %v138 = vsel %vm136, %v106, 0
  %140 = vmatpush.bf16.msra.mxu0 0
  %141 = vmatpush.bf16.msra.mxu0 0
  %142 = vmatpush.bf16.msra.mxu0 0
  %143 = vmatpush.bf16.msra.mxu0 %v138
  %144 = vmatpush.bf16.msra.mxu0 %v105
  %145 = vmatpush.bf16.msra.mxu0 %v104
  %146 = vmatpush.bf16.msra.mxu0 %v103
  %147 = vmatpush.bf16.msra.mxu0 %v102
  %148 = vmatmul.bf16.gmra.mxu0 %v113
  %v149 = vpop.f32.mrf.mxu0
  %v150 = vadd.f32 %v42, %v149
  %v151 = vpop.f32.mrf.mxu0
  %v152 = vadd.f32 %v42, %v151
  %153 = vmatmul.bf16.gmra.mxu0 %v116
  %v154 = vpop.f32.mrf.mxu0
  %v155 = vadd.f32 %v42, %v154
  %v156 = vpop.f32.mrf.mxu0
  %v157 = vadd.f32 %v42, %v156
  %158 = vmatmul.bf16.gmra.mxu0 %v119
  %v159 = vpop.f32.mrf.mxu0
  %v160 = vadd.f32 %v42, %v159
  %v161 = vpop.f32.mrf.mxu0
  %v162 = vadd.f32 %v42, %v161
  %163 = vmatmul.bf16.gmra.mxu0 %v122
  %v164 = vpop.f32.mrf.mxu0
  %v165 = vadd.f32 %v42, %v164
  %v166 = vpop.f32.mrf.mxu0
  %v167 = vadd.f32 %v42, %v166
  %168 = vmatmul.bf16.gmra.mxu0 %v125
  %v169 = vpop.f32.mrf.mxu0
  %v170 = vadd.f32 %v42, %v169
  %v171 = vpop.f32.mrf.mxu0
  %v172 = vadd.f32 %v42, %v171
  %173 = vmatmul.bf16.gmra.mxu0 %v128
  %v174 = vpop.f32.mrf.mxu0
  %v175 = vadd.f32 %v42, %v174
  %v176 = vpop.f32.mrf.mxu0
  %v177 = vadd.f32 %v42, %v176
  %178 = vmatmul.bf16.gmra.mxu0 %v131
  %v179 = vpop.f32.mrf.mxu0
  %v180 = vadd.f32 %v42, %v179
  %v181 = vpop.f32.mrf.mxu0
  %v182 = vadd.f32 %v42, %v181
  %183 = vmatmul.bf16.gmra.mxu0 %v134
  %v184 = vpop.f32.mrf.mxu0
  %v185 = vadd.f32 %v42, %v184
  %v186 = vpop.f32.mrf.mxu0
  %v187 = vadd.f32 %v42, %v186
  %188 = vdwg.mxu0
  %v189 = vpack.c.bf16 %v150, %v150
  %v190 = vpack.c.bf16 %v152, %v152
  %v191 = vpack.c.bf16 %v155, %v155
  %v192 = vpack.c.bf16 %v157, %v157
  %v193 = vpack.c.bf16 %v160, %v160
  %v194 = vpack.c.bf16 %v162, %v162
  %v195 = vpack.c.bf16 %v165, %v165
  %v196 = vpack.c.bf16 %v167, %v167
  %v197 = vpack.c.bf16 %v170, %v170
  %v198 = vpack.c.bf16 %v172, %v172
  %v199 = vpack.c.bf16 %v175, %v175
  %v200 = vpack.c.bf16 %v177, %v177
  %v201 = vpack.c.bf16 %v180, %v180
  %v202 = vpack.c.bf16 %v182, %v182
  %v203 = vpack.c.bf16 %v185, %v185
  %v204 = vpack.c.bf16 %v187, %v187
  %205 = vst [vmem:[%s3] sm:$0xf] %v189
  %206 = vst [vmem:[%s3 + $0x4] sm:$0xf] %v190
  %207 = vst [vmem:[%s3 + $0x8] sm:$0xf] %v191
  %208 = vst [vmem:[%s3 + $0xc] sm:$0xf] %v192
  %209 = vst [vmem:[%s3 + $0x10] sm:$0xf] %v193
  %210 = vst [vmem:[%s3 + $0x14] sm:$0xf] %v194
  %211 = vst [vmem:[%s3 + $0x18] sm:$0xf] %v195
  %212 = vst [vmem:[%s3 + $0x1c] sm:$0xf] %v196
  %213 = vst [vmem:[%s3 + $0x20] sm:$0xf] %v197
  %214 = vst [vmem:[%s3 + $0x24] sm:$0xf] %v198
  %215 = vst [vmem:[%s3 + $0x28] sm:$0xf] %v199
  %216 = vst [vmem:[%s3 + $0x2c] sm:$0xf] %v200
  %217 = vst [vmem:[%s3 + $0x30] sm:$0xf] %v201
  %218 = vst [vmem:[%s3 + $0x34] sm:$0xf] %v202
  %219 = vst [vmem:[%s3 + $0x38] sm:$0xf] %v203
  %220 = vst [vmem:[%s3 + $0x3c] sm:$0xf] %v204
  // Predicated region
  $region14: #{decoder_block_forward.3} parent=0 // pred_check
    _
  $region15: #{decoder_block_forward.3} parent=0 // pred_check_branch
    %222 = sbr.rel (0) target = $region17
  $region16: #{decoder_block_forward.3} parent=0 // pred_region
    _
  $region17: #{decoder_block_forward.3} parent=0 // pred_fallthru
    _
  // Predicated region
  $region18: #{decoder_block_forward.3} parent=0 // pred_check
    _
  $region19: #{decoder_block_forward.3} parent=0 // pred_check_branch
    %224 = sbr.rel (0) target = $region21
  $region20: #{decoder_block_forward.3} parent=0 // pred_region
    _
  $region21: #{decoder_block_forward.3} parent=0 // pred_fallthru
    _

// kernel: decoder_block_forward.5
$region0: #{decoder_block_forward.5}
  #allocation0 [shape = 'u32[]', space=smem, size = 0x4, offset = 0x4, fixed_abs, tag = 'smem constant byte address 0x4 - core index']
  #allocation1 [shape = 'u32[72,128]{1,0:T(1,128)}', space=vmem, size = 0x9000, scoped, tag = 'internal scratch']
  %s0 = inlined_call_operand.vmem [shape: f32[512,128], index: 0, kind: input, shape index: {}]
  %s1 = inlined_call_operand.vmem [shape: f32[1,128], index: 1, kind: input, shape index: {}]
  %s2 = inlined_call_operand.vmem [shape: f32[1,128], index: 2, kind: input, shape index: {}]
  %s3 = inlined_call_operand.vmem [shape: f32[512,128], index: 3, kind: output, shape index: {}]
  %s4 = sld [smem:[#allocation0]]
  $region22: #{decoder_block_forward.5} parent=0
    _
  %s6 = ssub.s32 1, %s4
  %s7 = scalar_select 0, %s6, %s4
  // Predicated region
  $region2: #{decoder_block_forward.5} parent=0 // pred_check
    _
  $region3: #{decoder_block_forward.5} parent=0 // pred_check_branch
    %9 = sbr.rel (0) target = $region5
  $region4: #{decoder_block_forward.5} parent=0 // pred_region
    _
  $region5: #{decoder_block_forward.5} parent=0 // pred_fallthru
    _
  // Predicated region
  $region6: #{decoder_block_forward.5} parent=0 // pred_check
    _
  $region7: #{decoder_block_forward.5} parent=0 // pred_check_branch
    %11 = sbr.rel (0) target = $region9
  $region8: #{decoder_block_forward.5} parent=0 // pred_region
    _
  $region9: #{decoder_block_forward.5} parent=0 // pred_fallthru
    _
  // Predicated region
  $region10: #{decoder_block_forward.5} parent=0 // pred_check
    _
  $region11: #{decoder_block_forward.5} parent=0 // pred_check_branch
    %13 = sbr.rel (0) target = $region13
  $region12: #{decoder_block_forward.5} parent=0 // pred_region
    _
  $region13: #{decoder_block_forward.5} parent=0 // pred_fallthru
    _
  %v14 = vld [vmem:[%s0] sm:$0xff]
  %v15 = vld [vmem:[%s0 + $0x8] sm:$0xff]
  %v16 = vld [vmem:[%s0 + $0x10] sm:$0xff]
  %v17 = vld [vmem:[%s0 + $0x18] sm:$0xff]
  %v18 = vld [vmem:[%s0 + $0x20] sm:$0xff]
  %v19 = vld [vmem:[%s0 + $0x28] sm:$0xff]
  %v20 = vld [vmem:[%s0 + $0x30] sm:$0xff]
  %v21 = vld [vmem:[%s0 + $0x38] sm:$0xff]
  %v22 = vld [vmem:[%s0 + $0x40] sm:$0xff]
  %v23 = vld [vmem:[%s0 + $0x48] sm:$0xff]
  %v24 = vld [vmem:[%s0 + $0x50] sm:$0xff]
  %v25 = vld [vmem:[%s0 + $0x58] sm:$0xff]
  %v26 = vld [vmem:[%s0 + $0x60] sm:$0xff]
  %v27 = vld [vmem:[%s0 + $0x68] sm:$0xff]
  %v28 = vld [vmem:[%s0 + $0x70] sm:$0xff]
  %v29 = vld [vmem:[%s0 + $0x78] sm:$0xff]
  %v30 = vld [vmem:[%s0 + $0x80] sm:$0xff]
  %v31 = vld [vmem:[%s0 + $0x88] sm:$0xff]
  %v32 = vld [vmem:[%s0 + $0x90] sm:$0xff]
  %v33 = vld [vmem:[%s0 + $0x98] sm:$0xff]
  %v34 = vld [vmem:[%s0 + $0xa0] sm:$0xff]
  %v35 = vld [vmem:[%s0 + $0xa8] sm:$0xff]
  %v36 = vld [vmem:[%s0 + $0xb0] sm:$0xff]
  %v37 = vld [vmem:[%s0 + $0xb8] sm:$0xff]
  %v38 = vld [vmem:[%s0 + $0xc0] sm:$0xff]
  %v39 = vld [vmem:[%s0 + $0xc8] sm:$0xff]
  %v40 = vld [vmem:[%s0 + $0xd0] sm:$0xff]
  %v41 = vld [vmem:[%s0 + $0xd8] sm:$0xff]
  %v42 = vld [vmem:[%s0 + $0xe0] sm:$0xff]
  %v43 = vld [vmem:[%s0 + $0xe8] sm:$0xff]
  %v44 = vld [vmem:[%s0 + $0xf0] sm:$0xff]
  %v45 = vld [vmem:[%s0 + $0xf8] sm:$0xff]
  %v46 = vld [vmem:[%s0 + $0x100] sm:$0xff]
  %v47 = vld [vmem:[%s0 + $0x108] sm:$0xff]
  %v48 = vld [vmem:[%s0 + $0x110] sm:$0xff]
  %v49 = vld [vmem:[%s0 + $0x118] sm:$0xff]
  %v50 = vld [vmem:[%s0 + $0x120] sm:$0xff]
  %v51 = vld [vmem:[%s0 + $0x128] sm:$0xff]
  %v52 = vld [vmem:[%s0 + $0x130] sm:$0xff]
  %v53 = vld [vmem:[%s0 + $0x138] sm:$0xff]
  %v54 = vld [vmem:[%s0 + $0x140] sm:$0xff]
  %v55 = vld [vmem:[%s0 + $0x148] sm:$0xff]
  %v56 = vld [vmem:[%s0 + $0x150] sm:$0xff]
  %v57 = vld [vmem:[%s0 + $0x158] sm:$0xff]
  %v58 = vld [vmem:[%s0 + $0x160] sm:$0xff]
  %v59 = vld [vmem:[%s0 + $0x168] sm:$0xff]
  %v60 = vld [vmem:[%s0 + $0x170] sm:$0xff]
  %v61 = vld [vmem:[%s0 + $0x178] sm:$0xff]
  %v62 = vld [vmem:[%s0 + $0x180] sm:$0xff]
  %v63 = vld [vmem:[%s0 + $0x188] sm:$0xff]
  %v64 = vld [vmem:[%s0 + $0x190] sm:$0xff]
  %v65 = vld [vmem:[%s0 + $0x198] sm:$0xff]
  %v66 = vld [vmem:[%s0 + $0x1a0] sm:$0xff]
  %v67 = vld [vmem:[%s0 + $0x1a8] sm:$0xff]
  %v68 = vld [vmem:[%s0 + $0x1b0] sm:$0xff]
  %v69 = vld [vmem:[%s0 + $0x1b8] sm:$0xff]
  %v70 = vld [vmem:[%s0 + $0x1c0] sm:$0xff]
  %v71 = vld [vmem:[%s0 + $0x1c8] sm:$0xff]
  %v72 = vld [vmem:[%s0 + $0x1d0] sm:$0xff]
  %v73 = vld [vmem:[%s0 + $0x1d8] sm:$0xff]
  %v74 = vld [vmem:[%s0 + $0x1e0] sm:$0xff]
  %v75 = vld [vmem:[%s0 + $0x1e8] sm:$0xff]
  %v76 = vld [vmem:[%s0 + $0x1f0] sm:$0xff]
  %v77 = vld [vmem:[%s0 + $0x1f8] sm:$0xff]
  %v78 = vld [vmem:[%s1] sm:$0x1]
  %v80 = vperm.slane %v78, 0
  %v82 = vmul.f32 %v14, %v80
  %v83 = vmul.f32 %v15, %v80
  %v84 = vmul.f32 %v16, %v80
  %v85 = vmul.f32 %v17, %v80
  %v86 = vmul.f32 %v18, %v80
  %v87 = vmul.f32 %v19, %v80
  %v88 = vmul.f32 %v20, %v80
  %v89 = vmul.f32 %v21, %v80
  %v90 = vmul.f32 %v22, %v80
  %v91 = vmul.f32 %v23, %v80
  %v92 = vmul.f32 %v24, %v80
  %v93 = vmul.f32 %v25, %v80
  %v94 = vmul.f32 %v26, %v80
  %v95 = vmul.f32 %v27, %v80
  %v96 = vmul.f32 %v28, %v80
  %v97 = vmul.f32 %v29, %v80
  %v98 = vmul.f32 %v30, %v80
  %v99 = vmul.f32 %v31, %v80
  %v100 = vmul.f32 %v32, %v80
  %v101 = vmul.f32 %v33, %v80
  %v102 = vmul.f32 %v34, %v80
  %v103 = vmul.f32 %v35, %v80
  %v104 = vmul.f32 %v36, %v80
  %v105 = vmul.f32 %v37, %v80
  %v106 = vmul.f32 %v38, %v80
  %v107 = vmul.f32 %v39, %v80
  %v108 = vmul.f32 %v40, %v80
  %v109 = vmul.f32 %v41, %v80
  %v110 = vmul.f32 %v42, %v80
  %v111 = vmul.f32 %v43, %v80
  %v112 = vmul.f32 %v44, %v80
  %v113 = vmul.f32 %v45, %v80
  %v114 = vmul.f32 %v46, %v80
  %v115 = vmul.f32 %v47, %v80
  %v116 = vmul.f32 %v48, %v80
  %v117 = vmul.f32 %v49, %v80
  %v118 = vmul.f32 %v50, %v80
  %v119 = vmul.f32 %v51, %v80
  %v120 = vmul.f32 %v52, %v80
  %v121 = vmul.f32 %v53, %v80
  %v122 = vmul.f32 %v54, %v80
  %v123 = vmul.f32 %v55, %v80
  %v124 = vmul.f32 %v56, %v80
  %v125 = vmul.f32 %v57, %v80
  %v126 = vmul.f32 %v58, %v80
  %v127 = vmul.f32 %v59, %v80
  %v128 = vmul.f32 %v60, %v80
  %v129 = vmul.f32 %v61, %v80
  %v130 = vmul.f32 %v62, %v80
  %v131 = vmul.f32 %v63, %v80
  %v132 = vmul.f32 %v64, %v80
  %v133 = vmul.f32 %v65, %v80
  %v134 = vmul.f32 %v66, %v80
  %v135 = vmul.f32 %v67, %v80
  %v136 = vmul.f32 %v68, %v80
  %v137 = vmul.f32 %v69, %v80
  %v138 = vmul.f32 %v70, %v80
  %v139 = vmul.f32 %v71, %v80
  %v140 = vmul.f32 %v72, %v80
  %v141 = vmul.f32 %v73, %v80
  %v142 = vmul.f32 %v74, %v80
  %v143 = vmul.f32 %v75, %v80
  %v144 = vmul.f32 %v76, %v80
  %v145 = vmul.f32 %v77, %v80
  %v146 = vld [vmem:[%s2] sm:$0x1]
  %v148 = vperm.slane %v146, 0
  %v150 = vadd.f32 %v82, %v148
  %v151 = vadd.f32 %v83, %v148
  %v152 = vadd.f32 %v84, %v148
  %v153 = vadd.f32 %v85, %v148
  %v154 = vadd.f32 %v86, %v148
  %v155 = vadd.f32 %v87, %v148
  %v156 = vadd.f32 %v88, %v148
  %v157 = vadd.f32 %v89, %v148
  %v158 = vadd.f32 %v90, %v148
  %v159 = vadd.f32 %v91, %v148
  %v160 = vadd.f32 %v92, %v148
  %v161 = vadd.f32 %v93, %v148
  %v162 = vadd.f32 %v94, %v148
  %v163 = vadd.f32 %v95, %v148
  %v164 = vadd.f32 %v96, %v148
  %v165 = vadd.f32 %v97, %v148
  %v166 = vadd.f32 %v98, %v148
  %v167 = vadd.f32 %v99, %v148
  %v168 = vadd.f32 %v100, %v148
  %v169 = vadd.f32 %v101, %v148
  %v170 = vadd.f32 %v102, %v148
  %v171 = vadd.f32 %v103, %v148
  %v172 = vadd.f32 %v104, %v148
  %v173 = vadd.f32 %v105, %v148
  %v174 = vadd.f32 %v106, %v148
  %v175 = vadd.f32 %v107, %v148
  %v176 = vadd.f32 %v108, %v148
  %v177 = vadd.f32 %v109, %v148
  %v178 = vadd.f32 %v110, %v148
  %v179 = vadd.f32 %v111, %v148
  %v180 = vadd.f32 %v112, %v148
  %v181 = vadd.f32 %v113, %v148
  %v182 = vadd.f32 %v114, %v148
  %v183 = vadd.f32 %v115, %v148
  %v184 = vadd.f32 %v116, %v148
  %v185 = vadd.f32 %v117, %v148
  %v186 = vadd.f32 %v118, %v148
  %v187 = vadd.f32 %v119, %v148
  %v188 = vadd.f32 %v120, %v148
  %v189 = vadd.f32 %v121, %v148
  %v190 = vadd.f32 %v122, %v148
  %v191 = vadd.f32 %v123, %v148
  %v192 = vadd.f32 %v124, %v148
  %v193 = vadd.f32 %v125, %v148
  %v194 = vadd.f32 %v126, %v148
  %v195 = vadd.f32 %v127, %v148
  %v196 = vadd.f32 %v128, %v148
  %v197 = vadd.f32 %v129, %v148
  %v198 = vadd.f32 %v130, %v148
  %v199 = vadd.f32 %v131, %v148
  %v200 = vadd.f32 %v132, %v148
  %v201 = vadd.f32 %v133, %v148
  %v202 = vadd.f32 %v134, %v148
  %v203 = vadd.f32 %v135, %v148
  %v204 = vadd.f32 %v136, %v148
  %v205 = vadd.f32 %v137, %v148
  %v206 = vadd.f32 %v138, %v148
  %v207 = vadd.f32 %v139, %v148
  %v208 = vadd.f32 %v140, %v148
  %v209 = vadd.f32 %v141, %v148
  %v210 = vadd.f32 %v142, %v148
  %v211 = vadd.f32 %v143, %v148
  %v212 = vadd.f32 %v144, %v148
  %v213 = vadd.f32 %v145, %v148
  %v214 = vmax.f32 %v150, 0.0
  %v215 = vmax.f32 %v151, 0.0
  %v216 = vmax.f32 %v152, 0.0
  %v217 = vmax.f32 %v153, 0.0
  %v218 = vmax.f32 %v154, 0.0
  %v219 = vmax.f32 %v155, 0.0
  %v220 = vmax.f32 %v156, 0.0
  %v221 = vmax.f32 %v157, 0.0
  %v222 = vmax.f32 %v158, 0.0
  %v223 = vmax.f32 %v159, 0.0
  %v224 = vmax.f32 %v160, 0.0
  %v225 = vmax.f32 %v161, 0.0
  %v226 = vmax.f32 %v162, 0.0
  %v227 = vmax.f32 %v163, 0.0
  %v228 = vmax.f32 %v164, 0.0
  %v229 = vmax.f32 %v165, 0.0
  %v230 = vmax.f32 %v166, 0.0
  %v231 = vmax.f32 %v167, 0.0
  %v232 = vmax.f32 %v168, 0.0
  %v233 = vmax.f32 %v169, 0.0
  %v234 = vmax.f32 %v170, 0.0
  %v235 = vmax.f32 %v171, 0.0
  %v236 = vmax.f32 %v172, 0.0
  %v237 = vmax.f32 %v173, 0.0
  %v238 = vmax.f32 %v174, 0.0
  %v239 = vmax.f32 %v175, 0.0
  %v240 = vmax.f32 %v176, 0.0
  %v241 = vmax.f32 %v177, 0.0
  %v242 = vmax.f32 %v178, 0.0
  %v243 = vmax.f32 %v179, 0.0
  %v244 = vmax.f32 %v180, 0.0
  %v245 = vmax.f32 %v181, 0.0
  %v246 = vmax.f32 %v182, 0.0
  %v247 = vmax.f32 %v183, 0.0
  %v248 = vmax.f32 %v184, 0.0
  %v249 = vmax.f32 %v185, 0.0
  %v250 = vmax.f32 %v186, 0.0
  %v251 = vmax.f32 %v187, 0.0
  %v252 = vmax.f32 %v188, 0.0
  %v253 = vmax.f32 %v189, 0.0
  %v254 = vmax.f32 %v190, 0.0
  %v255 = vmax.f32 %v191, 0.0
  %v256 = vmax.f32 %v192, 0.0
  %v257 = vmax.f32 %v193, 0.0
  %v258 = vmax.f32 %v194, 0.0
  %v259 = vmax.f32 %v195, 0.0
  %v260 = vmax.f32 %v196, 0.0
  %v261 = vmax.f32 %v197, 0.0
  %v262 = vmax.f32 %v198, 0.0
  %v263 = vmax.f32 %v199, 0.0
  %v264 = vmax.f32 %v200, 0.0
  %v265 = vmax.f32 %v201, 0.0
  %v266 = vmax.f32 %v202, 0.0
  %v267 = vmax.f32 %v203, 0.0
  %v268 = vmax.f32 %v204, 0.0
  %v269 = vmax.f32 %v205, 0.0
  %v270 = vmax.f32 %v206, 0.0
  %v271 = vmax.f32 %v207, 0.0
  %v272 = vmax.f32 %v208, 0.0
  %v273 = vmax.f32 %v209, 0.0
  %v274 = vmax.f32 %v210, 0.0
  %v275 = vmax.f32 %v211, 0.0
  %v276 = vmax.f32 %v212, 0.0
  %v277 = vmax.f32 %v213, 0.0
  %278 = vst [vmem:[%s3] sm:$0xff] %v214
  %279 = vst [vmem:[%s3 + $0x8] sm:$0xff] %v215
  %280 = vst [vmem:[%s3 + $0x10] sm:$0xff] %v216
  %281 = vst [vmem:[%s3 + $0x18] sm:$0xff] %v217
  %282 = vst [vmem:[%s3 + $0x20] sm:$0xff] %v218
  %283 = vst [vmem:[%s3 + $0x28] sm:$0xff] %v219
  %284 = vst [vmem:[%s3 + $0x30] sm:$0xff] %v220
  %285 = vst [vmem:[%s3 + $0x38] sm:$0xff] %v221
  %286 = vst [vmem:[%s3 + $0x40] sm:$0xff] %v222
  %287 = vst [vmem:[%s3 + $0x48] sm:$0xff] %v223
  %288 = vst [vmem:[%s3 + $0x50] sm:$0xff] %v224
  %289 = vst [vmem:[%s3 + $0x58] sm:$0xff] %v225
  %290 = vst [vmem:[%s3 + $0x60] sm:$0xff] %v226
  %291 = vst [vmem:[%s3 + $0x68] sm:$0xff] %v227
  %292 = vst [vmem:[%s3 + $0x70] sm:$0xff] %v228
  %293 = vst [vmem:[%s3 + $0x78] sm:$0xff] %v229
  %294 = vst [vmem:[%s3 + $0x80] sm:$0xff] %v230
  %295 = vst [vmem:[%s3 + $0x88] sm:$0xff] %v231
  %296 = vst [vmem:[%s3 + $0x90] sm:$0xff] %v232
  %297 = vst [vmem:[%s3 + $0x98] sm:$0xff] %v233
  %298 = vst [vmem:[%s3 + $0xa0] sm:$0xff] %v234
  %299 = vst [vmem:[%s3 + $0xa8] sm:$0xff] %v235
  %300 = vst [vmem:[%s3 + $0xb0] sm:$0xff] %v236
  %301 = vst [vmem:[%s3 + $0xb8] sm:$0xff] %v237
  %302 = vst [vmem:[%s3 + $0xc0] sm:$0xff] %v238
  %303 = vst [vmem:[%s3 + $0xc8] sm:$0xff] %v239
  %304 = vst [vmem:[%s3 + $0xd0] sm:$0xff] %v240
  %305 = vst [vmem:[%s3 + $0xd8] sm:$0xff] %v241
  %306 = vst [vmem:[%s3 + $0xe0] sm:$0xff] %v242
  %307 = vst [vmem:[%s3 + $0xe8] sm:$0xff] %v243
  %308 = vst [vmem:[%s3 + $0xf0] sm:$0xff] %v244
  %309 = vst [vmem:[%s3 + $0xf8] sm:$0xff] %v245
  %310 = vst [vmem:[%s3 + $0x100] sm:$0xff] %v246
  %311 = vst [vmem:[%s3 + $0x108] sm:$0xff] %v247
  %312 = vst [vmem:[%s3 + $0x110] sm:$0xff] %v248
  %313 = vst [vmem:[%s3 + $0x118] sm:$0xff] %v249
  %314 = vst [vmem:[%s3 + $0x120] sm:$0xff] %v250
  %315 = vst [vmem:[%s3 + $0x128] sm:$0xff] %v251
  %316 = vst [vmem:[%s3 + $0x130] sm:$0xff] %v252
  %317 = vst [vmem:[%s3 + $0x138] sm:$0xff] %v253
  %318 = vst [vmem:[%s3 + $0x140] sm:$0xff] %v254
  %319 = vst [vmem:[%s3 + $0x148] sm:$0xff] %v255
  %320 = vst [vmem:[%s3 + $0x150] sm:$0xff] %v256
  %321 = vst [vmem:[%s3 + $0x158] sm:$0xff] %v257
  %322 = vst [vmem:[%s3 + $0x160] sm:$0xff] %v258
  %323 = vst [vmem:[%s3 + $0x168] sm:$0xff] %v259
  %324 = vst [vmem:[%s3 + $0x170] sm:$0xff] %v260
  %325 = vst [vmem:[%s3 + $0x178] sm:$0xff] %v261
  %326 = vst [vmem:[%s3 + $0x180] sm:$0xff] %v262
  %327 = vst [vmem:[%s3 + $0x188] sm:$0xff] %v263
  %328 = vst [vmem:[%s3 + $0x190] sm:$0xff] %v264
  %329 = vst [vmem:[%s3 + $0x198] sm:$0xff] %v265
  %330 = vst [vmem:[%s3 + $0x1a0] sm:$0xff] %v266
  %331 = vst [vmem:[%s3 + $0x1a8] sm:$0xff] %v267
  %332 = vst [vmem:[%s3 + $0x1b0] sm:$0xff] %v268
  %333 = vst [vmem:[%s3 + $0x1b8] sm:$0xff] %v269
  %334 = vst [vmem:[%s3 + $0x1c0] sm:$0xff] %v270
  %335 = vst [vmem:[%s3 + $0x1c8] sm:$0xff] %v271
  %336 = vst [vmem:[%s3 + $0x1d0] sm:$0xff] %v272
  %337 = vst [vmem:[%s3 + $0x1d8] sm:$0xff] %v273
  %338 = vst [vmem:[%s3 + $0x1e0] sm:$0xff] %v274
  %339 = vst [vmem:[%s3 + $0x1e8] sm:$0xff] %v275
  %340 = vst [vmem:[%s3 + $0x1f0] sm:$0xff] %v276
  %341 = vst [vmem:[%s3 + $0x1f8] sm:$0xff] %v277
  // Predicated region
  $region14: #{decoder_block_forward.5} parent=0 // pred_check
    _
  $region15: #{decoder_block_forward.5} parent=0 // pred_check_branch
    %343 = sbr.rel (0) target = $region17
  $region16: #{decoder_block_forward.5} parent=0 // pred_region
    _
  $region17: #{decoder_block_forward.5} parent=0 // pred_fallthru
    _
  // Predicated region
  $region18: #{decoder_block_forward.5} parent=0 // pred_check
    _
  $region19: #{decoder_block_forward.5} parent=0 // pred_check_branch
    %345 = sbr.rel (0) target = $region21
  $region20: #{decoder_block_forward.5} parent=0 // pred_region
    _
  $region21: #{decoder_block_forward.5} parent=0 // pred_fallthru
    _

// kernel: decoder_block_forward.4
$region0: #{decoder_block_forward.4}
  #allocation0 [shape = 'u32[]', space=smem, size = 0x4, offset = 0x4, fixed_abs, tag = 'smem constant byte address 0x4 - core index']
  #allocation1 [shape = 'u32[72,128]{1,0:T(1,128)}', space=vmem, size = 0x9000, scoped, tag = 'internal scratch']
  %s0 = inlined_call_operand.vmem [shape: bf16[512,108], index: 0, kind: input, shape index: {}]
  %s1 = inlined_call_operand.vmem [shape: bf16[108,128], index: 1, kind: input, shape index: {}]
  %s2 = inlined_call_operand.vmem [shape: f32[512,128], index: 2, kind: output, shape index: {0}]
  %s3 = inlined_call_operand.vmem [shape: f32[1,2,128], index: 3, kind: output, shape index: {1}]
  %4 = xla_tuple %s2, %s3
  %s5 = sld [smem:[#allocation0]]
  $region26: #{decoder_block_forward.4} parent=0
    _
  %s7 = ssub.s32 1, %s5
  %s8 = scalar_select 0, %s7, %s5
  // Predicated region
  $region2: #{decoder_block_forward.4} parent=0 // pred_check
    _
  $region3: #{decoder_block_forward.4} parent=0 // pred_check_branch
    %10 = sbr.rel (0) target = $region5
  $region4: #{decoder_block_forward.4} parent=0 // pred_region
    _
  $region5: #{decoder_block_forward.4} parent=0 // pred_fallthru
    _
  // Predicated region
  $region6: #{decoder_block_forward.4} parent=0 // pred_check
    _
  $region7: #{decoder_block_forward.4} parent=0 // pred_check_branch
    %12 = sbr.rel (0) target = $region9
  $region8: #{decoder_block_forward.4} parent=0 // pred_region
    _
  $region9: #{decoder_block_forward.4} parent=0 // pred_fallthru
    _
  %v14 = vld [vmem:[%s0] sm:$0xf]
  %v15 = vld [vmem:[%s0 + $0x4] sm:$0xf]
  %v16 = vld [vmem:[%s0 + $0x8] sm:$0xf]
  %v17 = vld [vmem:[%s0 + $0xc] sm:$0xf]
  %v18 = vld [vmem:[%s0 + $0x10] sm:$0xf]
  %v19 = vld [vmem:[%s0 + $0x14] sm:$0xf]
  %v20 = vld [vmem:[%s0 + $0x18] sm:$0xf]
  %v21 = vld [vmem:[%s0 + $0x1c] sm:$0xf]
  %v22 = vld [vmem:[%s0 + $0x20] sm:$0xf]
  %v23 = vld [vmem:[%s0 + $0x24] sm:$0xf]
  %v24 = vld [vmem:[%s0 + $0x28] sm:$0xf]
  %v25 = vld [vmem:[%s0 + $0x2c] sm:$0xf]
  %v26 = vld [vmem:[%s0 + $0x30] sm:$0xf]
  %v27 = vld [vmem:[%s0 + $0x34] sm:$0xf]
  %v28 = vld [vmem:[%s0 + $0x38] sm:$0xf]
  %v29 = vld [vmem:[%s0 + $0x3c] sm:$0xf]
  %v30 = vld [vmem:[%s0 + $0x40] sm:$0xf]
  %v31 = vld [vmem:[%s0 + $0x44] sm:$0xf]
  %v32 = vld [vmem:[%s0 + $0x48] sm:$0xf]
  %v33 = vld [vmem:[%s0 + $0x4c] sm:$0xf]
  %v34 = vld [vmem:[%s0 + $0x50] sm:$0xf]
  %v35 = vld [vmem:[%s0 + $0x54] sm:$0xf]
  %v36 = vld [vmem:[%s0 + $0x58] sm:$0xf]
  %v37 = vld [vmem:[%s0 + $0x5c] sm:$0xf]
  %v38 = vld [vmem:[%s0 + $0x60] sm:$0xf]
  %v39 = vld [vmem:[%s0 + $0x64] sm:$0xf]
  %v40 = vld [vmem:[%s0 + $0x68] sm:$0xf]
  %v41 = vld [vmem:[%s0 + $0x6c] sm:$0xf]
  %v42 = vld [vmem:[%s0 + $0x70] sm:$0xf]
  %v43 = vld [vmem:[%s0 + $0x74] sm:$0xf]
  %v44 = vld [vmem:[%s0 + $0x78] sm:$0xf]
  %v45 = vld [vmem:[%s0 + $0x7c] sm:$0xf]
  %v46 = vld [vmem:[%s0 + $0x80] sm:$0xf]
  %v47 = vld [vmem:[%s0 + $0x84] sm:$0xf]
  %v48 = vld [vmem:[%s0 + $0x88] sm:$0xf]
  %v49 = vld [vmem:[%s0 + $0x8c] sm:$0xf]
  %v50 = vld [vmem:[%s0 + $0x90] sm:$0xf]
  %v51 = vld [vmem:[%s0 + $0x94] sm:$0xf]
  %v52 = vld [vmem:[%s0 + $0x98] sm:$0xf]
  %v53 = vld [vmem:[%s0 + $0x9c] sm:$0xf]
  %v54 = vld [vmem:[%s0 + $0xa0] sm:$0xf]
  %v55 = vld [vmem:[%s0 + $0xa4] sm:$0xf]
  %v56 = vld [vmem:[%s0 + $0xa8] sm:$0xf]
  %v57 = vld [vmem:[%s0 + $0xac] sm:$0xf]
  %v58 = vld [vmem:[%s0 + $0xb0] sm:$0xf]
  %v59 = vld [vmem:[%s0 + $0xb4] sm:$0xf]
  %v60 = vld [vmem:[%s0 + $0xb8] sm:$0xf]
  %v61 = vld [vmem:[%s0 + $0xbc] sm:$0xf]
  %v62 = vld [vmem:[%s0 + $0xc0] sm:$0xf]
  %v63 = vld [vmem:[%s0 + $0xc4] sm:$0xf]
  %v64 = vld [vmem:[%s0 + $0xc8] sm:$0xf]
  %v65 = vld [vmem:[%s0 + $0xcc] sm:$0xf]
  %v66 = vld [vmem:[%s0 + $0xd0] sm:$0xf]
  %v67 = vld [vmem:[%s0 + $0xd4] sm:$0xf]
  %v68 = vld [vmem:[%s0 + $0xd8] sm:$0xf]
  %v69 = vld [vmem:[%s0 + $0xdc] sm:$0xf]
  %v70 = vld [vmem:[%s0 + $0xe0] sm:$0xf]
  %v71 = vld [vmem:[%s0 + $0xe4] sm:$0xf]
  %v72 = vld [vmem:[%s0 + $0xe8] sm:$0xf]
  %v73 = vld [vmem:[%s0 + $0xec] sm:$0xf]
  %v74 = vld [vmem:[%s0 + $0xf0] sm:$0xf]
  %v75 = vld [vmem:[%s0 + $0xf4] sm:$0xf]
  %v76 = vld [vmem:[%s0 + $0xf8] sm:$0xf]
  %v77 = vld [vmem:[%s0 + $0xfc] sm:$0xf]
  %v78 = vld [vmem:[%s1] sm:$0xf]
  %v79 = vld [vmem:[%s1 + $0x4] sm:$0xf]
  %v80 = vld [vmem:[%s1 + $0x8] sm:$0xf]
  %v81 = vld [vmem:[%s1 + $0xc] sm:$0xf]
  %v82 = vld [vmem:[%s1 + $0x10] sm:$0xf]
  %v83 = vld [vmem:[%s1 + $0x14] sm:$0xf]
  %v84 = vld [vmem:[%s1 + $0x18] sm:$0xf]
  %v85 = vld [vmem:[%s1 + $0x1c] sm:$0xf]
  %v86 = vld [vmem:[%s1 + $0x20] sm:$0xf]
  %v87 = vld [vmem:[%s1 + $0x24] sm:$0xf]
  %v88 = vld [vmem:[%s1 + $0x28] sm:$0xf]
  %v89 = vld [vmem:[%s1 + $0x2c] sm:$0xf]
  %v90 = vld [vmem:[%s1 + $0x30] sm:$0xf]
  %v91 = vld [vmem:[%s1 + $0x34] sm:$0x3]
  %v156 = vunpack.c.l.b16 %v14
  %v157 = vunpack.c.l.b16 %v15
  %v158 = vunpack.c.l.b16 %v16
  %v159 = vunpack.c.l.b16 %v17
  %v160 = vunpack.c.l.b16 %v18
  %v161 = vunpack.c.l.b16 %v19
  %v162 = vunpack.c.l.b16 %v20
  %v163 = vunpack.c.l.b16 %v21
  %v164 = vunpack.c.l.b16 %v22
  %v165 = vunpack.c.l.b16 %v23
  %v166 = vunpack.c.l.b16 %v24
  %v167 = vunpack.c.l.b16 %v25
  %v168 = vunpack.c.l.b16 %v26
  %v169 = vunpack.c.l.b16 %v27
  %v170 = vunpack.c.l.b16 %v28
  %v171 = vunpack.c.l.b16 %v29
  %v172 = vunpack.c.l.b16 %v30
  %v173 = vunpack.c.l.b16 %v31
  %v174 = vunpack.c.l.b16 %v32
  %v175 = vunpack.c.l.b16 %v33
  %v176 = vunpack.c.l.b16 %v34
  %v177 = vunpack.c.l.b16 %v35
  %v178 = vunpack.c.l.b16 %v36
  %v179 = vunpack.c.l.b16 %v37
  %v180 = vunpack.c.l.b16 %v38
  %v181 = vunpack.c.l.b16 %v39
  %v182 = vunpack.c.l.b16 %v40
  %v183 = vunpack.c.l.b16 %v41
  %v184 = vunpack.c.l.b16 %v42
  %v185 = vunpack.c.l.b16 %v43
  %v186 = vunpack.c.l.b16 %v44
  %v187 = vunpack.c.l.b16 %v45
  %v188 = vunpack.c.l.b16 %v46
  %v189 = vunpack.c.l.b16 %v47
  %v190 = vunpack.c.l.b16 %v48
  %v191 = vunpack.c.l.b16 %v49
  %v192 = vunpack.c.l.b16 %v50
  %v193 = vunpack.c.l.b16 %v51
  %v194 = vunpack.c.l.b16 %v52
  %v195 = vunpack.c.l.b16 %v53
  %v196 = vunpack.c.l.b16 %v54
  %v197 = vunpack.c.l.b16 %v55
  %v198 = vunpack.c.l.b16 %v56
  %v199 = vunpack.c.l.b16 %v57
  %v200 = vunpack.c.l.b16 %v58
  %v201 = vunpack.c.l.b16 %v59
  %v202 = vunpack.c.l.b16 %v60
  %v203 = vunpack.c.l.b16 %v61
  %v204 = vunpack.c.l.b16 %v62
  %v205 = vunpack.c.l.b16 %v63
  %v206 = vunpack.c.l.b16 %v64
  %v207 = vunpack.c.l.b16 %v65
  %v208 = vunpack.c.l.b16 %v66
  %v209 = vunpack.c.l.b16 %v67
  %v210 = vunpack.c.l.b16 %v68
  %v211 = vunpack.c.l.b16 %v69
  %v212 = vunpack.c.l.b16 %v70
  %v213 = vunpack.c.l.b16 %v71
  %v214 = vunpack.c.l.b16 %v72
  %v215 = vunpack.c.l.b16 %v73
  %v216 = vunpack.c.l.b16 %v74
  %v217 = vunpack.c.l.b16 %v75
  %v218 = vunpack.c.l.b16 %v76
  %v219 = vunpack.c.l.b16 %v77
  %v220 = vpack.c.b16 %v157, %v156
  %v221 = vpack.c.b16 %v159, %v158
  %v222 = vpack.c.b16 %v161, %v160
  %v223 = vpack.c.b16 %v163, %v162
  %v224 = vpack.c.b16 %v165, %v164
  %v225 = vpack.c.b16 %v167, %v166
  %v226 = vpack.c.b16 %v169, %v168
  %v227 = vpack.c.b16 %v171, %v170
  %v228 = vpack.c.b16 %v173, %v172
  %v229 = vpack.c.b16 %v175, %v174
  %v230 = vpack.c.b16 %v177, %v176
  %v231 = vpack.c.b16 %v179, %v178
  %v232 = vpack.c.b16 %v181, %v180
  %v233 = vpack.c.b16 %v183, %v182
  %v234 = vpack.c.b16 %v185, %v184
  %v235 = vpack.c.b16 %v187, %v186
  %v236 = vpack.c.b16 %v189, %v188
  %v237 = vpack.c.b16 %v191, %v190
  %v238 = vpack.c.b16 %v193, %v192
  %v239 = vpack.c.b16 %v195, %v194
  %v240 = vpack.c.b16 %v197, %v196
  %v241 = vpack.c.b16 %v199, %v198
  %v242 = vpack.c.b16 %v201, %v200
  %v243 = vpack.c.b16 %v203, %v202
  %v244 = vpack.c.b16 %v205, %v204
  %v245 = vpack.c.b16 %v207, %v206
  %v246 = vpack.c.b16 %v209, %v208
  %v247 = vpack.c.b16 %v211, %v210
  %v248 = vpack.c.b16 %v213, %v212
  %v249 = vpack.c.b16 %v215, %v214
  %v250 = vpack.c.b16 %v217, %v216
  %v251 = vpack.c.b16 %v219, %v218
  %v266 = vunpack.c.l.b16 %v78
  %v267 = vunpack.c.l.b16 %v79
  %v268 = vunpack.c.l.b16 %v80
  %v269 = vunpack.c.l.b16 %v81
  %v270 = vunpack.c.l.b16 %v82
  %v271 = vunpack.c.l.b16 %v83
  %v272 = vunpack.c.l.b16 %v84
  %v273 = vunpack.c.l.b16 %v85
  %v274 = vunpack.c.l.b16 %v86
  %v275 = vunpack.c.l.b16 %v87
  %v276 = vunpack.c.l.b16 %v88
  %v277 = vunpack.c.l.b16 %v89
  %v278 = vunpack.c.l.b16 %v90
  %v279 = vunpack.c.l.b16 %v91
  %v280 = vpack.c.b16 %v267, %v266
  %v281 = vpack.c.b16 %v269, %v268
  %v282 = vpack.c.b16 %v271, %v270
  %v283 = vpack.c.b16 %v273, %v272
  %v284 = vpack.c.b16 %v275, %v274
  %v285 = vpack.c.b16 %v277, %v276
  %v286 = vpack.c.b16 %v279, %v278
  %vm293 = vcmask 883712
  %v295 = vsel %vm293, %v220, 0
  %v298 = vsel %vm293, %v221, 0
  %v301 = vsel %vm293, %v222, 0
  %v304 = vsel %vm293, %v223, 0
  %v307 = vsel %vm293, %v224, 0
  %v310 = vsel %vm293, %v225, 0
  %v313 = vsel %vm293, %v226, 0
  %v316 = vsel %vm293, %v227, 0
  %v319 = vsel %vm293, %v228, 0
  %v322 = vsel %vm293, %v229, 0
  %v325 = vsel %vm293, %v230, 0
  %v328 = vsel %vm293, %v231, 0
  %v331 = vsel %vm293, %v232, 0
  %v334 = vsel %vm293, %v233, 0
  %v337 = vsel %vm293, %v234, 0
  %v340 = vsel %vm293, %v235, 0
  %v343 = vsel %vm293, %v236, 0
  %v346 = vsel %vm293, %v237, 0
  %v349 = vsel %vm293, %v238, 0
  %v352 = vsel %vm293, %v239, 0
  %v355 = vsel %vm293, %v240, 0
  %v358 = vsel %vm293, %v241, 0
  %v361 = vsel %vm293, %v242, 0
  %v364 = vsel %vm293, %v243, 0
  %v367 = vsel %vm293, %v244, 0
  %v370 = vsel %vm293, %v245, 0
  %v373 = vsel %vm293, %v246, 0
  %v376 = vsel %vm293, %v247, 0
  %v379 = vsel %vm293, %v248, 0
  %v382 = vsel %vm293, %v249, 0
  %v385 = vsel %vm293, %v250, 0
  %v388 = vsel %vm293, %v251, 0
  %vm390 = vcmask 1045504
  %v392 = vsel %vm390, %v286, 0
  %394 = vmatpush.bf16.msra.mxu0 0
  %395 = vmatpush.bf16.msra.mxu0 %v392
  %396 = vmatpush.bf16.msra.mxu0 %v285
  %397 = vmatpush.bf16.msra.mxu0 %v284
  %398 = vmatpush.bf16.msra.mxu0 %v283
  %399 = vmatpush.bf16.msra.mxu0 %v282
  %400 = vmatpush.bf16.msra.mxu0 %v281
  %401 = vmatpush.bf16.msra.mxu0 %v280
  %402 = vmatmul.bf16.gmra.mxu0 %v295
  %v403 = vpop.f32.mrf.mxu0
  %v404 = vadd.f32 0.0, %v403
  %v405 = vpop.f32.mrf.mxu0
  %v406 = vadd.f32 0.0, %v405
  %407 = vmatmul.bf16.gmra.mxu0 %v298
  %v408 = vpop.f32.mrf.mxu0
  %v409 = vadd.f32 0.0, %v408
  %v410 = vpop.f32.mrf.mxu0
  %v411 = vadd.f32 0.0, %v410
  %412 = vmatmul.bf16.gmra.mxu0 %v301
  %v413 = vpop.f32.mrf.mxu0
  %v414 = vadd.f32 0.0, %v413
  %v415 = vpop.f32.mrf.mxu0
  %v416 = vadd.f32 0.0, %v415
  %417 = vmatmul.bf16.gmra.mxu0 %v304
  %v418 = vpop.f32.mrf.mxu0
  %v419 = vadd.f32 0.0, %v418
  %v420 = vpop.f32.mrf.mxu0
  %v421 = vadd.f32 0.0, %v420
  %422 = vmatmul.bf16.gmra.mxu0 %v307
  %v423 = vpop.f32.mrf.mxu0
  %v424 = vadd.f32 0.0, %v423
  %v425 = vpop.f32.mrf.mxu0
  %v426 = vadd.f32 0.0, %v425
  %427 = vmatmul.bf16.gmra.mxu0 %v310
  %v428 = vpop.f32.mrf.mxu0
  %v429 = vadd.f32 0.0, %v428
  %v430 = vpop.f32.mrf.mxu0
  %v431 = vadd.f32 0.0, %v430
  %432 = vmatmul.bf16.gmra.mxu0 %v313
  %v433 = vpop.f32.mrf.mxu0
  %v434 = vadd.f32 0.0, %v433
  %v435 = vpop.f32.mrf.mxu0
  %v436 = vadd.f32 0.0, %v435
  %437 = vmatmul.bf16.gmra.mxu0 %v316
  %v438 = vpop.f32.mrf.mxu0
  %v439 = vadd.f32 0.0, %v438
  %v440 = vpop.f32.mrf.mxu0
  %v441 = vadd.f32 0.0, %v440
  %442 = vmatmul.bf16.gmra.mxu0 %v319
  %v443 = vpop.f32.mrf.mxu0
  %v444 = vadd.f32 0.0, %v443
  %v445 = vpop.f32.mrf.mxu0
  %v446 = vadd.f32 0.0, %v445
  %447 = vmatmul.bf16.gmra.mxu0 %v322
  %v448 = vpop.f32.mrf.mxu0
  %v449 = vadd.f32 0.0, %v448
  %v450 = vpop.f32.mrf.mxu0
  %v451 = vadd.f32 0.0, %v450
  %452 = vmatmul.bf16.gmra.mxu0 %v325
  %v453 = vpop.f32.mrf.mxu0
  %v454 = vadd.f32 0.0, %v453
  %v455 = vpop.f32.mrf.mxu0
  %v456 = vadd.f32 0.0, %v455
  %457 = vmatmul.bf16.gmra.mxu0 %v328
  %v458 = vpop.f32.mrf.mxu0
  %v459 = vadd.f32 0.0, %v458
  %v460 = vpop.f32.mrf.mxu0
  %v461 = vadd.f32 0.0, %v460
  %462 = vmatmul.bf16.gmra.mxu0 %v331
  %v463 = vpop.f32.mrf.mxu0
  %v464 = vadd.f32 0.0, %v463
  %v465 = vpop.f32.mrf.mxu0
  %v466 = vadd.f32 0.0, %v465
  %467 = vmatmul.bf16.gmra.mxu0 %v334
  %v468 = vpop.f32.mrf.mxu0
  %v469 = vadd.f32 0.0, %v468
  %v470 = vpop.f32.mrf.mxu0
  %v471 = vadd.f32 0.0, %v470
  %472 = vmatmul.bf16.gmra.mxu0 %v337
  %v473 = vpop.f32.mrf.mxu0
  %v474 = vadd.f32 0.0, %v473
  %v475 = vpop.f32.mrf.mxu0
  %v476 = vadd.f32 0.0, %v475
  %477 = vmatmul.bf16.gmra.mxu0 %v340
  %v478 = vpop.f32.mrf.mxu0
  %v479 = vadd.f32 0.0, %v478
  %v480 = vpop.f32.mrf.mxu0
  %v481 = vadd.f32 0.0, %v480
  %482 = vmatmul.bf16.gmra.mxu0 %v343
  %v483 = vpop.f32.mrf.mxu0
  %v484 = vadd.f32 0.0, %v483
  %v485 = vpop.f32.mrf.mxu0
  %v486 = vadd.f32 0.0, %v485
  %487 = vmatmul.bf16.gmra.mxu0 %v346
  %v488 = vpop.f32.mrf.mxu0
  %v489 = vadd.f32 0.0, %v488
  %v490 = vpop.f32.mrf.mxu0
  %v491 = vadd.f32 0.0, %v490
  %492 = vmatmul.bf16.gmra.mxu0 %v349
  %v493 = vpop.f32.mrf.mxu0
  %v494 = vadd.f32 0.0, %v493
  %v495 = vpop.f32.mrf.mxu0
  %v496 = vadd.f32 0.0, %v495
  %497 = vmatmul.bf16.gmra.mxu0 %v352
  %v498 = vpop.f32.mrf.mxu0
  %v499 = vadd.f32 0.0, %v498
  %v500 = vpop.f32.mrf.mxu0
  %v501 = vadd.f32 0.0, %v500
  %502 = vmatmul.bf16.gmra.mxu0 %v355
  %v503 = vpop.f32.mrf.mxu0
  %v504 = vadd.f32 0.0, %v503
  %v505 = vpop.f32.mrf.mxu0
  %v506 = vadd.f32 0.0, %v505
  %507 = vmatmul.bf16.gmra.mxu0 %v358
  %v508 = vpop.f32.mrf.mxu0
  %v509 = vadd.f32 0.0, %v508
  %v510 = vpop.f32.mrf.mxu0
  %v511 = vadd.f32 0.0, %v510
  %512 = vmatmul.bf16.gmra.mxu0 %v361
  %v513 = vpop.f32.mrf.mxu0
  %v514 = vadd.f32 0.0, %v513
  %v515 = vpop.f32.mrf.mxu0
  %v516 = vadd.f32 0.0, %v515
  %517 = vmatmul.bf16.gmra.mxu0 %v364
  %v518 = vpop.f32.mrf.mxu0
  %v519 = vadd.f32 0.0, %v518
  %v520 = vpop.f32.mrf.mxu0
  %v521 = vadd.f32 0.0, %v520
  %522 = vmatmul.bf16.gmra.mxu0 %v367
  %v523 = vpop.f32.mrf.mxu0
  %v524 = vadd.f32 0.0, %v523
  %v525 = vpop.f32.mrf.mxu0
  %v526 = vadd.f32 0.0, %v525
  %527 = vmatmul.bf16.gmra.mxu0 %v370
  %v528 = vpop.f32.mrf.mxu0
  %v529 = vadd.f32 0.0, %v528
  %v530 = vpop.f32.mrf.mxu0
  %v531 = vadd.f32 0.0, %v530
  %532 = vmatmul.bf16.gmra.mxu0 %v373
  %v533 = vpop.f32.mrf.mxu0
  %v534 = vadd.f32 0.0, %v533
  %v535 = vpop.f32.mrf.mxu0
  %v536 = vadd.f32 0.0, %v535
  %537 = vmatmul.bf16.gmra.mxu0 %v376
  %v538 = vpop.f32.mrf.mxu0
  %v539 = vadd.f32 0.0, %v538
  %v540 = vpop.f32.mrf.mxu0
  %v541 = vadd.f32 0.0, %v540
  %542 = vmatmul.bf16.gmra.mxu0 %v379
  %v543 = vpop.f32.mrf.mxu0
  %v544 = vadd.f32 0.0, %v543
  %v545 = vpop.f32.mrf.mxu0
  %v546 = vadd.f32 0.0, %v545
  %547 = vmatmul.bf16.gmra.mxu0 %v382
  %v548 = vpop.f32.mrf.mxu0
  %v549 = vadd.f32 0.0, %v548
  %v550 = vpop.f32.mrf.mxu0
  %v551 = vadd.f32 0.0, %v550
  %552 = vmatmul.bf16.gmra.mxu0 %v385
  %v553 = vpop.f32.mrf.mxu0
  %v554 = vadd.f32 0.0, %v553
  %v555 = vpop.f32.mrf.mxu0
  %v556 = vadd.f32 0.0, %v555
  %557 = vmatmul.bf16.gmra.mxu0 %v388
  %v558 = vpop.f32.mrf.mxu0
  %v559 = vadd.f32 0.0, %v558
  %v560 = vpop.f32.mrf.mxu0
  %v561 = vadd.f32 0.0, %v560
  %562 = vdwg.mxu0
  %563 = vst [vmem:[%s2] sm:$0xff] %v404
  %564 = vst [vmem:[%s2 + $0x8] sm:$0xff] %v406
  %565 = vst [vmem:[%s2 + $0x10] sm:$0xff] %v409
  %566 = vst [vmem:[%s2 + $0x18] sm:$0xff] %v411
  %567 = vst [vmem:[%s2 + $0x20] sm:$0xff] %v414
  %568 = vst [vmem:[%s2 + $0x28] sm:$0xff] %v416
  %569 = vst [vmem:[%s2 + $0x30] sm:$0xff] %v419
  %570 = vst [vmem:[%s2 + $0x38] sm:$0xff] %v421
  %571 = vst [vmem:[%s2 + $0x40] sm:$0xff] %v424
  %572 = vst [vmem:[%s2 + $0x48] sm:$0xff] %v426
  %573 = vst [vmem:[%s2 + $0x50] sm:$0xff] %v429
  %574 = vst [vmem:[%s2 + $0x58] sm:$0xff] %v431
  %575 = vst [vmem:[%s2 + $0x60] sm:$0xff] %v434
  %576 = vst [vmem:[%s2 + $0x68] sm:$0xff] %v436
  %577 = vst [vmem:[%s2 + $0x70] sm:$0xff] %v439
  %578 = vst [vmem:[%s2 + $0x78] sm:$0xff] %v441
  %579 = vst [vmem:[%s2 + $0x80] sm:$0xff] %v444
  %580 = vst [vmem:[%s2 + $0x88] sm:$0xff] %v446
  %581 = vst [vmem:[%s2 + $0x90] sm:$0xff] %v449
  %582 = vst [vmem:[%s2 + $0x98] sm:$0xff] %v451
  %583 = vst [vmem:[%s2 + $0xa0] sm:$0xff] %v454
  %584 = vst [vmem:[%s2 + $0xa8] sm:$0xff] %v456
  %585 = vst [vmem:[%s2 + $0xb0] sm:$0xff] %v459
  %586 = vst [vmem:[%s2 + $0xb8] sm:$0xff] %v461
  %587 = vst [vmem:[%s2 + $0xc0] sm:$0xff] %v464
  %588 = vst [vmem:[%s2 + $0xc8] sm:$0xff] %v466
  %589 = vst [vmem:[%s2 + $0xd0] sm:$0xff] %v469
  %590 = vst [vmem:[%s2 + $0xd8] sm:$0xff] %v471
  %591 = vst [vmem:[%s2 + $0xe0] sm:$0xff] %v474
  %592 = vst [vmem:[%s2 + $0xe8] sm:$0xff] %v476
  %593 = vst [vmem:[%s2 + $0xf0] sm:$0xff] %v479
  %594 = vst [vmem:[%s2 + $0xf8] sm:$0xff] %v481
  %595 = vst [vmem:[%s2 + $0x100] sm:$0xff] %v484
  %596 = vst [vmem:[%s2 + $0x108] sm:$0xff] %v486
  %597 = vst [vmem:[%s2 + $0x110] sm:$0xff] %v489
  %598 = vst [vmem:[%s2 + $0x118] sm:$0xff] %v491
  %599 = vst [vmem:[%s2 + $0x120] sm:$0xff] %v494
  %600 = vst [vmem:[%s2 + $0x128] sm:$0xff] %v496
  %601 = vst [vmem:[%s2 + $0x130] sm:$0xff] %v499
  %602 = vst [vmem:[%s2 + $0x138] sm:$0xff] %v501
  %603 = vst [vmem:[%s2 + $0x140] sm:$0xff] %v504
  %604 = vst [vmem:[%s2 + $0x148] sm:$0xff] %v506
  %605 = vst [vmem:[%s2 + $0x150] sm:$0xff] %v509
  %606 = vst [vmem:[%s2 + $0x158] sm:$0xff] %v511
  %607 = vst [vmem:[%s2 + $0x160] sm:$0xff] %v514
  %608 = vst [vmem:[%s2 + $0x168] sm:$0xff] %v516
  %609 = vst [vmem:[%s2 + $0x170] sm:$0xff] %v519
  %610 = vst [vmem:[%s2 + $0x178] sm:$0xff] %v521
  %611 = vst [vmem:[%s2 + $0x180] sm:$0xff] %v524
  %612 = vst [vmem:[%s2 + $0x188] sm:$0xff] %v526
  %613 = vst [vmem:[%s2 + $0x190] sm:$0xff] %v529
  %614 = vst [vmem:[%s2 + $0x198] sm:$0xff] %v531
  %615 = vst [vmem:[%s2 + $0x1a0] sm:$0xff] %v534
  %616 = vst [vmem:[%s2 + $0x1a8] sm:$0xff] %v536
  %617 = vst [vmem:[%s2 + $0x1b0] sm:$0xff] %v539
  %618 = vst [vmem:[%s2 + $0x1b8] sm:$0xff] %v541
  %619 = vst [vmem:[%s2 + $0x1c0] sm:$0xff] %v544
  %620 = vst [vmem:[%s2 + $0x1c8] sm:$0xff] %v546
  %621 = vst [vmem:[%s2 + $0x1d0] sm:$0xff] %v549
  %622 = vst [vmem:[%s2 + $0x1d8] sm:$0xff] %v551
  %623 = vst [vmem:[%s2 + $0x1e0] sm:$0xff] %v554
  %624 = vst [vmem:[%s2 + $0x1e8] sm:$0xff] %v556
  %625 = vst [vmem:[%s2 + $0x1f0] sm:$0xff] %v559
  %626 = vst [vmem:[%s2 + $0x1f8] sm:$0xff] %v561
  %v627 = vadd.f32 %v404, %v406
  %v628 = vadd.f32 %v627, %v409
  %v629 = vadd.f32 %v628, %v411
  %v630 = vadd.f32 %v629, %v414
  %v631 = vadd.f32 %v630, %v416
  %v632 = vadd.f32 %v631, %v419
  %v633 = vadd.f32 %v632, %v421
  %v634 = vadd.f32 %v633, %v424
  %v635 = vadd.f32 %v634, %v426
  %v636 = vadd.f32 %v635, %v429
  %v637 = vadd.f32 %v636, %v431
  %v638 = vadd.f32 %v637, %v434
  %v639 = vadd.f32 %v638, %v436
  %v640 = vadd.f32 %v639, %v439
  %v641 = vadd.f32 %v640, %v441
  %v642 = vadd.f32 %v641, %v444
  %v643 = vadd.f32 %v642, %v446
  %v644 = vadd.f32 %v643, %v449
  %v645 = vadd.f32 %v644, %v451
  %v646 = vadd.f32 %v645, %v454
  %v647 = vadd.f32 %v646, %v456
  %v648 = vadd.f32 %v647, %v459
  %v649 = vadd.f32 %v648, %v461
  %v650 = vadd.f32 %v649, %v464
  %v651 = vadd.f32 %v650, %v466
  %v652 = vadd.f32 %v651, %v469
  %v653 = vadd.f32 %v652, %v471
  %v654 = vadd.f32 %v653, %v474
  %v655 = vadd.f32 %v654, %v476
  %v656 = vadd.f32 %v655, %v479
  %v657 = vadd.f32 %v656, %v481
  %v658 = vadd.f32 %v657, %v484
  %v659 = vadd.f32 %v658, %v486
  %v660 = vadd.f32 %v659, %v489
  %v661 = vadd.f32 %v660, %v491
  %v662 = vadd.f32 %v661, %v494
  %v663 = vadd.f32 %v662, %v496
  %v664 = vadd.f32 %v663, %v499
  %v665 = vadd.f32 %v664, %v501
  %v666 = vadd.f32 %v665, %v504
  %v667 = vadd.f32 %v666, %v506
  %v668 = vadd.f32 %v667, %v509
  %v669 = vadd.f32 %v668, %v511
  %v670 = vadd.f32 %v669, %v514
  %v671 = vadd.f32 %v670, %v516
  %v672 = vadd.f32 %v671, %v519
  %v673 = vadd.f32 %v672, %v521
  %v674 = vadd.f32 %v673, %v524
  %v675 = vadd.f32 %v674, %v526
  %v676 = vadd.f32 %v675, %v529
  %v677 = vadd.f32 %v676, %v531
  %v678 = vadd.f32 %v677, %v534
  %v679 = vadd.f32 %v678, %v536
  %v680 = vadd.f32 %v679, %v539
  %v681 = vadd.f32 %v680, %v541
  %v682 = vadd.f32 %v681, %v544
  %v683 = vadd.f32 %v682, %v546
  %v684 = vadd.f32 %v683, %v549
  %v685 = vadd.f32 %v684, %v551
  %v686 = vadd.f32 %v685, %v554
  %v687 = vadd.f32 %v686, %v556
  %v688 = vadd.f32 %v687, %v559
  %v689 = vadd.f32 %v688, %v561
  %v690 = vrot.slane %v689, 4
  %v691 = vadd.f32 %v689, %v690
  %v692 = vrot.slane %v691, 2
  %v693 = vadd.f32 %v691, %v692
  %v694 = vrot.slane %v693, 1
  %v695 = vadd.f32 %v693, %v694
  %v696 = vmul.f32 %v404, %v404
  %v697 = vmul.f32 %v406, %v406
  %v698 = vmul.f32 %v409, %v409
  %v699 = vmul.f32 %v411, %v411
  %v700 = vmul.f32 %v414, %v414
  %v701 = vmul.f32 %v416, %v416
  %v702 = vmul.f32 %v419, %v419
  %v703 = vmul.f32 %v421, %v421
  %v704 = vmul.f32 %v424, %v424
  %v705 = vmul.f32 %v426, %v426
  %v706 = vmul.f32 %v429, %v429
  %v707 = vmul.f32 %v431, %v431
  %v708 = vmul.f32 %v434, %v434
  %v709 = vmul.f32 %v436, %v436
  %v710 = vmul.f32 %v439, %v439
  %v711 = vmul.f32 %v441, %v441
  %v712 = vmul.f32 %v444, %v444
  %v713 = vmul.f32 %v446, %v446
  %v714 = vmul.f32 %v449, %v449
  %v715 = vmul.f32 %v451, %v451
  %v716 = vmul.f32 %v454, %v454
  %v717 = vmul.f32 %v456, %v456
  %v718 = vmul.f32 %v459, %v459
  %v719 = vmul.f32 %v461, %v461
  %v720 = vmul.f32 %v464, %v464
  %v721 = vmul.f32 %v466, %v466
  %v722 = vmul.f32 %v469, %v469
  %v723 = vmul.f32 %v471, %v471
  %v724 = vmul.f32 %v474, %v474
  %v725 = vmul.f32 %v476, %v476
  %v726 = vmul.f32 %v479, %v479
  %v727 = vmul.f32 %v481, %v481
  %v728 = vmul.f32 %v484, %v484
  %v729 = vmul.f32 %v486, %v486
  %v730 = vmul.f32 %v489, %v489
  %v731 = vmul.f32 %v491, %v491
  %v732 = vmul.f32 %v494, %v494
  %v733 = vmul.f32 %v496, %v496
  %v734 = vmul.f32 %v499, %v499
  %v735 = vmul.f32 %v501, %v501
  %v736 = vmul.f32 %v504, %v504
  %v737 = vmul.f32 %v506, %v506
  %v738 = vmul.f32 %v509, %v509
  %v739 = vmul.f32 %v511, %v511
  %v740 = vmul.f32 %v514, %v514
  %v741 = vmul.f32 %v516, %v516
  %v742 = vmul.f32 %v519, %v519
  %v743 = vmul.f32 %v521, %v521
  %v744 = vmul.f32 %v524, %v524
  %v745 = vmul.f32 %v526, %v526
  %v746 = vmul.f32 %v529, %v529
  %v747 = vmul.f32 %v531, %v531
  %v748 = vmul.f32 %v534, %v534
  %v749 = vmul.f32 %v536, %v536
  %v750 = vmul.f32 %v539, %v539
  %v751 = vmul.f32 %v541, %v541
  %v752 = vmul.f32 %v544, %v544
  %v753 = vmul.f32 %v546, %v546
  %v754 = vmul.f32 %v549, %v549
  %v755 = vmul.f32 %v551, %v551
  %v756 = vmul.f32 %v554, %v554
  %v757 = vmul.f32 %v556, %v556
  %v758 = vmul.f32 %v559, %v559
  %v759 = vmul.f32 %v561, %v561
  %v760 = vadd.f32 %v696, %v697
  %v761 = vadd.f32 %v760, %v698
  %v762 = vadd.f32 %v761, %v699
  %v763 = vadd.f32 %v762, %v700
  %v764 = vadd.f32 %v763, %v701
  %v765 = vadd.f32 %v764, %v702
  %v766 = vadd.f32 %v765, %v703
  %v767 = vadd.f32 %v766, %v704
  %v768 = vadd.f32 %v767, %v705
  %v769 = vadd.f32 %v768, %v706
  %v770 = vadd.f32 %v769, %v707
  %v771 = vadd.f32 %v770, %v708
  %v772 = vadd.f32 %v771, %v709
  %v773 = vadd.f32 %v772, %v710
  %v774 = vadd.f32 %v773, %v711
  %v775 = vadd.f32 %v774, %v712
  %v776 = vadd.f32 %v775, %v713
  %v777 = vadd.f32 %v776, %v714
  %v778 = vadd.f32 %v777, %v715
  %v779 = vadd.f32 %v778, %v716
  %v780 = vadd.f32 %v779, %v717
  %v781 = vadd.f32 %v780, %v718
  %v782 = vadd.f32 %v781, %v719
  %v783 = vadd.f32 %v782, %v720
  %v784 = vadd.f32 %v783, %v721
  %v785 = vadd.f32 %v784, %v722
  %v786 = vadd.f32 %v785, %v723
  %v787 = vadd.f32 %v786, %v724
  %v788 = vadd.f32 %v787, %v725
  %v789 = vadd.f32 %v788, %v726
  %v790 = vadd.f32 %v789, %v727
  %v791 = vadd.f32 %v790, %v728
  %v792 = vadd.f32 %v791, %v729
  %v793 = vadd.f32 %v792, %v730
  %v794 = vadd.f32 %v793, %v731
  %v795 = vadd.f32 %v794, %v732
  %v796 = vadd.f32 %v795, %v733
  %v797 = vadd.f32 %v796, %v734
  %v798 = vadd.f32 %v797, %v735
  %v799 = vadd.f32 %v798, %v736
  %v800 = vadd.f32 %v799, %v737
  %v801 = vadd.f32 %v800, %v738
  %v802 = vadd.f32 %v801, %v739
  %v803 = vadd.f32 %v802, %v740
  %v804 = vadd.f32 %v803, %v741
  %v805 = vadd.f32 %v804, %v742
  %v806 = vadd.f32 %v805, %v743
  %v807 = vadd.f32 %v806, %v744
  %v808 = vadd.f32 %v807, %v745
  %v809 = vadd.f32 %v808, %v746
  %v810 = vadd.f32 %v809, %v747
  %v811 = vadd.f32 %v810, %v748
  %v812 = vadd.f32 %v811, %v749
  %v813 = vadd.f32 %v812, %v750
  %v814 = vadd.f32 %v813, %v751
  %v815 = vadd.f32 %v814, %v752
  %v816 = vadd.f32 %v815, %v753
  %v817 = vadd.f32 %v816, %v754
  %v818 = vadd.f32 %v817, %v755
  %v819 = vadd.f32 %v818, %v756
  %v820 = vadd.f32 %v819, %v757
  %v821 = vadd.f32 %v820, %v758
  %v822 = vadd.f32 %v821, %v759
  %v823 = vrot.slane %v822, 4
  %v824 = vadd.f32 %v822, %v823
  %v825 = vrot.slane %v824, 2
  %v826 = vadd.f32 %v824, %v825
  %v827 = vrot.slane %v826, 1
  %v828 = vadd.f32 %v826, %v827
  %vm829 = vcmask 1040384
  %v830 = vsel %vm829, %v695, %v828
  %831 = vst [vmem:[%s3] sm:$0x3] %v830
  // Predicated region
  $region10: #{decoder_block_forward.4} parent=0 // pred_check
    _
  $region11: #{decoder_block_forward.4} parent=0 // pred_check_branch
    %833 = sbr.rel (0) target = $region13
  $region12: #{decoder_block_forward.4} parent=0 // pred_region
    _
  $region13: #{decoder_block_forward.4} parent=0 // pred_fallthru
    _
  // Predicated region
  $region14: #{decoder_block_forward.4} parent=0 // pred_check
    _
  $region15: #{decoder_block_forward.4} parent=0 // pred_check_branch
    %835 = sbr.rel (0) target = $region17
  $region16: #{decoder_block_forward.4} parent=0 // pred_region
    _
  $region17: #{decoder_block_forward.4} parent=0 // pred_fallthru
    _
  // Predicated region
  $region18: #{decoder_block_forward.4} parent=0 // pred_check
    _
  $region19: #{decoder_block_forward.4} parent=0 // pred_check_branch
    %837 = sbr.rel (0) target = $region21
  $region20: #{decoder_block_forward.4} parent=0 // pred_region
    _
  $region21: #{decoder_block_forward.4} parent=0 // pred_fallthru
    _
  // Predicated region
  $region22: #{decoder_block_forward.4} parent=0 // pred_check
    _
  $region23: #{decoder_block_forward.4} parent=0 // pred_check_branch
    %839 = sbr.rel (0) target = $region25
  $region24: #{decoder_block_forward.4} parent=0 // pred_region
    _
  $region25: #{decoder_block_forward.4} parent=0 // pred_fallthru
    _

</llo_original>
